<compile_context>
chip_gen: v5e
topology: v5e:2x2
jax: 0.10.0
libtpu: 0.0.40
codegen_flags: <defaults>
</compile_context>

<pallas_src>
import functools

import jax
import jax.numpy as jnp
from jax.experimental import pallas as pl
from jax.experimental.pallas import tpu as pltpu


def _layer_norm(x, gamma, beta, eps=1e-5):
    mean = jnp.mean(x, axis=-1, keepdims=True)
    var = jnp.mean((x - mean) ** 2, axis=-1, keepdims=True)   # biased var, like torch
    return (x - mean) * jax.lax.rsqrt(var + eps) * gamma + beta


def transformer_stack_kernel(
    x_ref, bias_ref,
    wqkv_ref, bqkv_ref, wo_ref, bo_ref,
    g1_ref, be1_ref,
    wg_ref, w1_ref, b1_ref, w2_ref, b2_ref,
    g2_ref, be2_ref,
    out_ref,
    *, num_layers: int, nhead: int,
):
    bs, hidden = x_ref.shape                 # (B*S, H)
    hd = hidden // nhead

    x = x_ref[...]                           # (B*S, H) f32, VMEM-resident across layers
    bias = bias_ref[...]                     # (B*S, B*S) f32: 0 = attend, -1e30 = masked
                                             # (block-diagonal across batch + key padding)

    for l in range(num_layers):              # static -> fully unrolled
        xb = x.astype(jnp.bfloat16)

        # ---------- fused QKV projection (scale already folded into Wq/bq) ----------
        qkv = jnp.dot(xb, wqkv_ref[l],
                      preferred_element_type=jnp.float32) + bqkv_ref[l]   # (B*S, 3H)

        # ---------- multi-head self attention on the flattened (B*S) axis ----------
        o_heads = []
        for h in range(nhead):               # static; 2 small MXU ops per head
            q = qkv[:, h * hd:(h + 1) * hd].astype(jnp.bfloat16)
            k = qkv[:, hidden + h * hd: hidden + (h + 1) * hd].astype(jnp.bfloat16)
            v = qkv[:, 2 * hidden + h * hd: 2 * hidden + (h + 1) * hd].astype(jnp.bfloat16)

            s = jax.lax.dot_general(q, k, (((1,), (1,)), ((), ())),
                                    preferred_element_type=jnp.float32)   # (B*S, B*S)
            s = s + bias
            m = jnp.max(s, axis=-1, keepdims=True)
            p = jnp.exp(s - m)
            p = p * pl.reciprocal(jnp.sum(p, axis=-1, keepdims=True), approx=True)

            o_heads.append(jnp.dot(p.astype(jnp.bfloat16), v,
                                   preferred_element_type=jnp.float32))   # (B*S, hd)

        # ---------- merged output projection: one (B*S,H)@(H,H) matmul ----------
        o_all = jnp.concatenate(o_heads, axis=-1)                          # (B*S, H)
        attn = jnp.dot(o_all.astype(jnp.bfloat16), wo_ref[l],
                       preferred_element_type=jnp.float32) + bo_ref[l]

        # ---------- post-norm residual 1 ----------
        x = _layer_norm(x + attn, g1_ref[l], be1_ref[l])

        # ---------- gated feed-forward (gate -> mul -> relu -> linear2) ----------
        gate = jax.nn.sigmoid(jnp.sum(x * wg_ref[l], axis=-1, keepdims=True))  # (B*S, 1)
        h1 = jnp.dot(x.astype(jnp.bfloat16), w1_ref[l],
                     preferred_element_type=jnp.float32) + b1_ref[l]            # (B*S, F)
        h1 = jnp.maximum(h1 * gate, 0.0)
        ff = jnp.dot(h1.astype(jnp.bfloat16), w2_ref[l],
                     preferred_element_type=jnp.float32) + b2_ref[l]            # (B*S, H)

        # ---------- post-norm residual 2 ----------
        x = _layer_norm(x + ff, g2_ref[l], be2_ref[l])

    out_ref[...] = x                          # (B*S, 128): lane-dense unmasked stores


def init_layer_params(key, hidden_dim, ffn_dim):
    """Torch-layout parameters for one TransformerLayer."""
    ks = jax.random.split(key, 8)
    s = 0.02
    H, F = hidden_dim, ffn_dim
    return {
        # nn.MultiheadAttention
        "in_proj_w": s * jax.random.normal(ks[0], (3 * H, H), jnp.float32),
        "in_proj_b": s * jax.random.normal(ks[1], (3 * H,), jnp.float32),
        "out_proj_w": s * jax.random.normal(ks[2], (H, H), jnp.float32),
        "out_proj_b": s * jax.random.normal(ks[3], (H,), jnp.float32),
        # LayerNorm 1 (torch default init)
        "ln1_g": jnp.ones((H,), jnp.float32), "ln1_b": jnp.zeros((H,), jnp.float32),
        # gated FFN
        "gate_w": s * jax.random.normal(ks[4], (1, H), jnp.float32),   # gate_linear (no bias)
        "lin1_w": s * jax.random.normal(ks[5], (F, H), jnp.float32),
        "lin1_b": s * jax.random.normal(ks[6], (F,), jnp.float32),
        "lin2_w": s * jax.random.normal(ks[7], (H, F), jnp.float32),
        "lin2_b": jnp.zeros((H,), jnp.float32),
        # LayerNorm 2
        "ln2_g": jnp.ones((H,), jnp.float32), "ln2_b": jnp.zeros((H,), jnp.float32),
    }


def pack_params(layer_params, nhead):
    """Stack per-layer torch-layout params into fused / pre-transposed kernel arrays."""
    H = layer_params[0]["in_proj_w"].shape[1]
    F = layer_params[0]["lin1_w"].shape[0]
    hd = H // nhead
    scale = 1.0 / (hd ** 0.5)
    bf16 = jnp.bfloat16

    def stack(fn, dtype=jnp.float32):
        return jnp.stack([fn(p) for p in layer_params]).astype(dtype)

    def fused_qkv_w(p):                        # (H, 3H), columns = [Q | K | V]
        wq = p["in_proj_w"][:H].T * scale      # fold 1/sqrt(hd) into Wq
        wk = p["in_proj_w"][H:2 * H].T
        wv = p["in_proj_w"][2 * H:].T
        return jnp.concatenate([wq, wk, wv], axis=1)

    def fused_qkv_b(p):                        # (1, 3H)
        bq = p["in_proj_b"][:H] * scale        # fold 1/sqrt(hd) into bq
        bk = p["in_proj_b"][H:2 * H]
        bv = p["in_proj_b"][2 * H:]
        return jnp.concatenate([bq, bk, bv]).reshape(1, 3 * H)

    return dict(
        wqkv=stack(fused_qkv_w, bf16),                        # (L, H, 3H)
        bqkv=stack(fused_qkv_b),                              # (L, 1, 3H)
        wo=stack(lambda p: p["out_proj_w"].T, bf16),          # (L, H, H)
        bo=stack(lambda p: p["out_proj_b"].reshape(1, H)),
        g1=stack(lambda p: p["ln1_g"].reshape(1, H)),
        be1=stack(lambda p: p["ln1_b"].reshape(1, H)),
        wg=stack(lambda p: p["gate_w"].reshape(1, H)),
        w1=stack(lambda p: p["lin1_w"].T, bf16),              # (L, H, F)
        b1=stack(lambda p: p["lin1_b"].reshape(1, F)),
        w2=stack(lambda p: p["lin2_w"].T, bf16),              # (L, F, H)
        b2=stack(lambda p: p["lin2_b"].reshape(1, H)),
        g2=stack(lambda p: p["ln2_g"].reshape(1, H)),
        be2=stack(lambda p: p["ln2_b"].reshape(1, H)),
    )


def transformer_multilayer_forward(embedding, attention_mask, packed, *, nhead):
    """Equivalent of TransformerMultiLayer.forward — one fused pallas_call."""
    B, S, H = embedding.shape
    L = packed["wqkv"].shape[0]
    BS = B * S

    x2d = embedding.reshape(BS, H).astype(jnp.float32)

    # Host-precomputed additive score bias over the flattened (B*S, B*S) axis:
    # 0 where (same batch element AND key is a real token), -1e30 elsewhere.
    # Keep in f32: -1e30 would overflow to -inf in bf16.
    batch_ids = jnp.arange(BS, dtype=jnp.int32) // S
    same_batch = batch_ids[:, None] == batch_ids[None, :]
    key_ok = attention_mask.reshape(BS).astype(jnp.float32) > 0.5
    score_bias = jnp.where(same_batch & key_ok[None, :], 0.0, -1e30).astype(jnp.float32)

    order = ["wqkv", "bqkv", "wo", "bo", "g1", "be1",
             "wg", "w1", "b1", "w2", "b2", "g2", "be2"]
    weights = [packed[k] for k in order]

    kernel = functools.partial(transformer_stack_kernel, num_layers=L, nhead=nhead)
    vmem = pltpu.MemorySpace.VMEM
    out2d = pl.pallas_call(
        kernel,
        out_shape=jax.ShapeDtypeStruct((BS, H), jnp.float32),
        in_specs=[pl.BlockSpec(memory_space=vmem)] * (2 + len(weights)),
        out_specs=pl.BlockSpec(memory_space=vmem),
    )(x2d, score_bias, *weights)
    return out2d.reshape(B, S, H)


def reference_forward(embedding, attention_mask, layer_params, *, nhead):
    """Pure-JAX f32 reference of the PyTorch module (dropout=0)."""
    B, S, H = embedding.shape
    hd = H // nhead
    x = embedding.astype(jnp.float32)
    bias = jnp.where(attention_mask[:, None, None, :] > 0.5, 0.0, -1e30)   # (B,1,1,S)
    for p in layer_params:
        wq, wk, wv = jnp.split(p["in_proj_w"], 3, axis=0)
        bq, bk, bv = jnp.split(p["in_proj_b"], 3, axis=0)
        q, k, v = x @ wq.T + bq, x @ wk.T + bk, x @ wv.T + bv

        def split_heads(t):
            return t.reshape(B, S, nhead, hd).transpose(0, 2, 1, 3)
        qh, kh, vh = split_heads(q), split_heads(k), split_heads(v)
        s = jnp.einsum("bhqd,bhkd->bhqk", qh, kh) / (hd ** 0.5) + bias
        pa = jax.nn.softmax(s, axis=-1)
        o = jnp.einsum("bhqk,bhkd->bhqd", pa, vh).transpose(0, 2, 1, 3).reshape(B, S, H)
        attn = o @ p["out_proj_w"].T + p["out_proj_b"]
        x = _layer_norm(x + attn, p["ln1_g"], p["ln1_b"])

        g = jax.nn.sigmoid(x @ p["gate_w"].T)
        h1 = x @ p["lin1_w"].T + p["lin1_b"]
        h1 = jnp.maximum(h1 * g, 0.0)
        ff = h1 @ p["lin2_w"].T + p["lin2_b"]
        x = _layer_norm(x + ff, p["ln2_g"], p["ln2_b"])
    return x


if __name__ == "__main__":
    # Module defaults: hidden_dim=128, ffn_dim=256, num_attention_head=2,
    # num_layer=2, dropout=0.
    B, S, H, F, NHEAD, NLAYER = 2, 8, 128, 256, 2, 2

    key = jax.random.PRNGKey(0)
    k_emb, k_p = jax.random.split(key)
    embedding = jax.random.normal(k_emb, (B, S, H), jnp.float32)

    # attention_mask: 1 = real token, 0 = padding (the module inverts it into a
    # torch key_padding_mask).  Pad the last two tokens of batch element 1.
    attention_mask = jnp.ones((B, S), jnp.float32)
    attention_mask = attention_mask.at[1, -2:].set(0.0)

    layer_keys = jax.random.split(k_p, NLAYER)
    layer_params = [init_layer_params(k, H, F) for k in layer_keys]
    packed = pack_params(layer_params, NHEAD)

    out = transformer_multilayer_forward(embedding, attention_mask, packed, nhead=NHEAD)
    out = jax.block_until_ready(out)

    ref = reference_forward(embedding, attention_mask, layer_params, nhead=NHEAD)

    assert out.shape == (B, S, H)
    assert bool(jnp.all(jnp.isfinite(out)))
    # Loose tolerance: kernel uses bf16 MXU feeds + approx reciprocal vs f32 reference.
    assert float(jnp.max(jnp.abs(out - ref))) < 0.1, "mismatch vs pure-JAX reference"
    print("KERNEL_OK")
</pallas_src>

<mosaic_0001>
module attributes {stable_mosaic.version = 11 : i64} {
  func.func @transformer_stack_kernel(%arg0: memref<16x128xf32, #tpu.memory_space<vmem>>, %arg1: memref<16x16xf32, #tpu.memory_space<vmem>>, %arg2: memref<2x128x384xbf16, #tpu.memory_space<vmem>>, %arg3: memref<2x1x384xf32, #tpu.memory_space<vmem>>, %arg4: memref<2x128x128xbf16, #tpu.memory_space<vmem>>, %arg5: memref<2x1x128xf32, #tpu.memory_space<vmem>>, %arg6: memref<2x1x128xf32, #tpu.memory_space<vmem>>, %arg7: memref<2x1x128xf32, #tpu.memory_space<vmem>>, %arg8: memref<2x1x128xf32, #tpu.memory_space<vmem>>, %arg9: memref<2x128x256xbf16, #tpu.memory_space<vmem>>, %arg10: memref<2x1x256xf32, #tpu.memory_space<vmem>>, %arg11: memref<2x256x128xbf16, #tpu.memory_space<vmem>>, %arg12: memref<2x1x128xf32, #tpu.memory_space<vmem>>, %arg13: memref<2x1x128xf32, #tpu.memory_space<vmem>>, %arg14: memref<2x1x128xf32, #tpu.memory_space<vmem>>, %arg15: memref<16x128xf32, #tpu.memory_space<vmem>>) attributes {dimension_semantics = [], scalar_prefetch = 0 : i64, scratch_operands = 0 : i64, tpu.core_type = #tpu.core_type<tc>} {
    %c0 = arith.constant 0 : index
    %c0_0 = arith.constant 0 : index
    %0 = vector.load %arg0[%c0, %c0_0] : memref<16x128xf32, #tpu.memory_space<vmem>>, vector<16x128xf32>
    %c0_1 = arith.constant 0 : index
    %c0_2 = arith.constant 0 : index
    %1 = vector.load %arg1[%c0_1, %c0_2] : memref<16x16xf32, #tpu.memory_space<vmem>>, vector<16x16xf32>
    %2 = arith.truncf %0 : vector<16x128xf32> to vector<16x128xbf16>
    %c0_3 = arith.constant 0 : index
    %c0_4 = arith.constant 0 : index
    %c0_5 = arith.constant 0 : index
    %3 = vector.load %arg2[%c0_3, %c0_4, %c0_5] : memref<2x128x384xbf16, #tpu.memory_space<vmem>>, vector<1x128x384xbf16>
    %4 = vector.shape_cast %3 : vector<1x128x384xbf16> to vector<128x384xbf16>
    %cst = arith.constant dense<0.000000e+00> : vector<16x384xf32>
    %5 = tpu.matmul %2, %4, %cst {dimension_numbers = #tpu.dot_dimension_numbers<[1], [0], [0], [1], [0, 0, 1, 1], [], []>} : vector<16x128xbf16>, vector<128x384xbf16>, vector<16x384xf32> -> vector<16x384xf32>
    %c0_6 = arith.constant 0 : index
    %c0_7 = arith.constant 0 : index
    %c0_8 = arith.constant 0 : index
    %6 = vector.load %arg3[%c0_6, %c0_7, %c0_8] : memref<2x1x384xf32, #tpu.memory_space<vmem>>, vector<1x1x384xf32>
    %7 = vector.shape_cast %6 : vector<1x1x384xf32> to vector<1x384xf32>
    %8 = vector.broadcast %7 : vector<1x384xf32> to vector<16x384xf32>
    %9 = arith.addf %5, %8 : vector<16x384xf32>
    %10 = vector.extract_strided_slice %9 {offsets = [0, 0], sizes = [16, 64], strides = [1, 1]} : vector<16x384xf32> to vector<16x64xf32>
    %11 = arith.truncf %10 : vector<16x64xf32> to vector<16x64xbf16>
    %12 = vector.extract_strided_slice %9 {offsets = [0, 128], sizes = [16, 64], strides = [1, 1]} : vector<16x384xf32> to vector<16x64xf32>
    %13 = arith.truncf %12 : vector<16x64xf32> to vector<16x64xbf16>
    %14 = vector.extract_strided_slice %9 {offsets = [0, 256], sizes = [16, 64], strides = [1, 1]} : vector<16x384xf32> to vector<16x64xf32>
    %15 = arith.truncf %14 : vector<16x64xf32> to vector<16x64xbf16>
    %cst_9 = arith.constant dense<0.000000e+00> : vector<16x16xf32>
    %16 = tpu.matmul %11, %13, %cst_9 {dimension_numbers = #tpu.dot_dimension_numbers<[1], [1], [0], [0], [0, 0, 1, 0], [], []>} : vector<16x64xbf16>, vector<16x64xbf16>, vector<16x16xf32> -> vector<16x16xf32>
    %17 = arith.addf %16, %1 : vector<16x16xf32>
    %cst_10 = arith.constant dense<0xFF800000> : vector<16xf32>
    %18 = vector.multi_reduction <maximumf>, %17, %cst_10 [1] : vector<16x16xf32> to vector<16xf32>
    %19 = vector.shape_cast %18 : vector<16xf32> to vector<16x1xf32>
    %20 = vector.broadcast %19 : vector<16x1xf32> to vector<16x16xf32>
    %21 = arith.subf %17, %20 : vector<16x16xf32>
    %22 = math.exp %21 : vector<16x16xf32>
    %cst_11 = arith.constant dense<0.000000e+00> : vector<16xf32>
    %23 = vector.multi_reduction <add>, %22, %cst_11 [1] : vector<16x16xf32> to vector<16xf32>
    %24 = vector.shape_cast %23 : vector<16xf32> to vector<16x1xf32>
    %25 = tpu.reciprocal %24 {approx = true} : vector<16x1xf32> -> vector<16x1xf32>
    %26 = vector.broadcast %25 : vector<16x1xf32> to vector<16x16xf32>
    %27 = arith.mulf %22, %26 : vector<16x16xf32>
    %28 = arith.truncf %27 : vector<16x16xf32> to vector<16x16xbf16>
    %cst_12 = arith.constant dense<0.000000e+00> : vector<16x64xf32>
    %29 = tpu.matmul %28, %15, %cst_12 {dimension_numbers = #tpu.dot_dimension_numbers<[1], [0], [0], [1], [0, 0, 1, 1], [], []>} : vector<16x16xbf16>, vector<16x64xbf16>, vector<16x64xf32> -> vector<16x64xf32>
    %30 = vector.extract_strided_slice %9 {offsets = [0, 64], sizes = [16, 64], strides = [1, 1]} : vector<16x384xf32> to vector<16x64xf32>
    %31 = arith.truncf %30 : vector<16x64xf32> to vector<16x64xbf16>
    %32 = vector.extract_strided_slice %9 {offsets = [0, 192], sizes = [16, 64], strides = [1, 1]} : vector<16x384xf32> to vector<16x64xf32>
    %33 = arith.truncf %32 : vector<16x64xf32> to vector<16x64xbf16>
    %34 = vector.extract_strided_slice %9 {offsets = [0, 320], sizes = [16, 64], strides = [1, 1]} : vector<16x384xf32> to vector<16x64xf32>
    %35 = arith.truncf %34 : vector<16x64xf32> to vector<16x64xbf16>
    %cst_13 = arith.constant dense<0.000000e+00> : vector<16x16xf32>
    %36 = tpu.matmul %31, %33, %cst_13 {dimension_numbers = #tpu.dot_dimension_numbers<[1], [1], [0], [0], [0, 0, 1, 0], [], []>} : vector<16x64xbf16>, vector<16x64xbf16>, vector<16x16xf32> -> vector<16x16xf32>
    %37 = arith.addf %36, %1 : vector<16x16xf32>
    %cst_14 = arith.constant dense<0xFF800000> : vector<16xf32>
    %38 = vector.multi_reduction <maximumf>, %37, %cst_14 [1] : vector<16x16xf32> to vector<16xf32>
    %39 = vector.shape_cast %38 : vector<16xf32> to vector<16x1xf32>
    %40 = vector.broadcast %39 : vector<16x1xf32> to vector<16x16xf32>
    %41 = arith.subf %37, %40 : vector<16x16xf32>
    %42 = math.exp %41 : vector<16x16xf32>
    %cst_15 = arith.constant dense<0.000000e+00> : vector<16xf32>
    %43 = vector.multi_reduction <add>, %42, %cst_15 [1] : vector<16x16xf32> to vector<16xf32>
    %44 = vector.shape_cast %43 : vector<16xf32> to vector<16x1xf32>
    %45 = tpu.reciprocal %44 {approx = true} : vector<16x1xf32> -> vector<16x1xf32>
    %46 = vector.broadcast %45 : vector<16x1xf32> to vector<16x16xf32>
    %47 = arith.mulf %42, %46 : vector<16x16xf32>
    %48 = arith.truncf %47 : vector<16x16xf32> to vector<16x16xbf16>
    %cst_16 = arith.constant dense<0.000000e+00> : vector<16x64xf32>
    %49 = tpu.matmul %48, %35, %cst_16 {dimension_numbers = #tpu.dot_dimension_numbers<[1], [0], [0], [1], [0, 0, 1, 1], [], []>} : vector<16x16xbf16>, vector<16x64xbf16>, vector<16x64xf32> -> vector<16x64xf32>
    %50 = tpu.concatenate %29, %49 in 1 : vector<16x64xf32>, vector<16x64xf32> -> vector<16x128xf32>
    %51 = arith.truncf %50 : vector<16x128xf32> to vector<16x128xbf16>
    %c0_17 = arith.constant 0 : index
    %c0_18 = arith.constant 0 : index
    %c0_19 = arith.constant 0 : index
    %52 = vector.load %arg4[%c0_17, %c0_18, %c0_19] : memref<2x128x128xbf16, #tpu.memory_space<vmem>>, vector<1x128x128xbf16>
    %53 = vector.shape_cast %52 : vector<1x128x128xbf16> to vector<128x128xbf16>
    %cst_20 = arith.constant dense<0.000000e+00> : vector<16x128xf32>
    %54 = tpu.matmul %51, %53, %cst_20 {dimension_numbers = #tpu.dot_dimension_numbers<[1], [0], [0], [1], [0, 0, 1, 1], [], []>} : vector<16x128xbf16>, vector<128x128xbf16>, vector<16x128xf32> -> vector<16x128xf32>
    %c0_21 = arith.constant 0 : index
    %c0_22 = arith.constant 0 : index
    %c0_23 = arith.constant 0 : index
    %55 = vector.load %arg5[%c0_21, %c0_22, %c0_23] : memref<2x1x128xf32, #tpu.memory_space<vmem>>, vector<1x1x128xf32>
    %56 = vector.shape_cast %55 : vector<1x1x128xf32> to vector<1x128xf32>
    %57 = vector.broadcast %56 : vector<1x128xf32> to vector<16x128xf32>
    %58 = arith.addf %54, %57 : vector<16x128xf32>
    %59 = arith.addf %0, %58 : vector<16x128xf32>
    %c0_24 = arith.constant 0 : index
    %c0_25 = arith.constant 0 : index
    %c0_26 = arith.constant 0 : index
    %60 = vector.load %arg6[%c0_24, %c0_25, %c0_26] : memref<2x1x128xf32, #tpu.memory_space<vmem>>, vector<1x1x128xf32>
    %61 = vector.shape_cast %60 : vector<1x1x128xf32> to vector<1x128xf32>
    %c0_27 = arith.constant 0 : index
    %c0_28 = arith.constant 0 : index
    %c0_29 = arith.constant 0 : index
    %62 = vector.load %arg7[%c0_27, %c0_28, %c0_29] : memref<2x1x128xf32, #tpu.memory_space<vmem>>, vector<1x1x128xf32>
    %63 = vector.shape_cast %62 : vector<1x1x128xf32> to vector<1x128xf32>
    %cst_30 = arith.constant dense<0.000000e+00> : vector<16xf32>
    %64 = vector.multi_reduction <add>, %59, %cst_30 [1] : vector<16x128xf32> to vector<16xf32>
    %65 = vector.shape_cast %64 : vector<16xf32> to vector<16x1xf32>
    %cst_31 = arith.constant 1.280000e+02 : f32
    %66 = vector.broadcast %cst_31 : f32 to vector<16x1xf32>
    %67 = arith.divf %65, %66 : vector<16x1xf32>
    %68 = vector.broadcast %67 : vector<16x1xf32> to vector<16x128xf32>
    %69 = arith.subf %59, %68 : vector<16x128xf32>
    %70 = arith.mulf %69, %69 : vector<16x128xf32>
    %cst_32 = arith.constant dense<0.000000e+00> : vector<16xf32>
    %71 = vector.multi_reduction <add>, %70, %cst_32 [1] : vector<16x128xf32> to vector<16xf32>
    %72 = vector.shape_cast %71 : vector<16xf32> to vector<16x1xf32>
    %cst_33 = arith.constant 1.280000e+02 : f32
    %73 = vector.broadcast %cst_33 : f32 to vector<16x1xf32>
    %74 = arith.divf %72, %73 : vector<16x1xf32>
    %75 = vector.broadcast %67 : vector<16x1xf32> to vector<16x128xf32>
    %76 = arith.subf %59, %75 : vector<16x128xf32>
    %cst_34 = arith.constant 9.99999974E-6 : f32
    %77 = vector.broadcast %cst_34 : f32 to vector<16x1xf32>
    %78 = arith.addf %74, %77 : vector<16x1xf32>
    %79 = math.rsqrt %78 : vector<16x1xf32>
    %80 = vector.broadcast %79 : vector<16x1xf32> to vector<16x128xf32>
    %81 = arith.mulf %76, %80 : vector<16x128xf32>
    %82 = vector.broadcast %61 : vector<1x128xf32> to vector<16x128xf32>
    %83 = arith.mulf %81, %82 : vector<16x128xf32>
    %84 = vector.broadcast %63 : vector<1x128xf32> to vector<16x128xf32>
    %85 = arith.addf %83, %84 : vector<16x128xf32>
    %c0_35 = arith.constant 0 : index
    %c0_36 = arith.constant 0 : index
    %c0_37 = arith.constant 0 : index
    %86 = vector.load %arg8[%c0_35, %c0_36, %c0_37] : memref<2x1x128xf32, #tpu.memory_space<vmem>>, vector<1x1x128xf32>
    %87 = vector.shape_cast %86 : vector<1x1x128xf32> to vector<1x128xf32>
    %88 = vector.broadcast %87 : vector<1x128xf32> to vector<16x128xf32>
    %89 = arith.mulf %85, %88 : vector<16x128xf32>
    %cst_38 = arith.constant dense<0.000000e+00> : vector<16xf32>
    %90 = vector.multi_reduction <add>, %89, %cst_38 [1] : vector<16x128xf32> to vector<16xf32>
    %91 = vector.shape_cast %90 : vector<16xf32> to vector<16x1xf32>
    %92 = arith.negf %91 : vector<16x1xf32>
    %93 = math.exp %92 : vector<16x1xf32>
    %cst_39 = arith.constant 1.000000e+00 : f32
    %94 = vector.broadcast %cst_39 : f32 to vector<16x1xf32>
    %95 = arith.addf %94, %93 : vector<16x1xf32>
    %96 = arith.divf %94, %95 : vector<16x1xf32>
    %97 = arith.truncf %85 : vector<16x128xf32> to vector<16x128xbf16>
    %c0_40 = arith.constant 0 : index
    %c0_41 = arith.constant 0 : index
    %c0_42 = arith.constant 0 : index
    %98 = vector.load %arg9[%c0_40, %c0_41, %c0_42] : memref<2x128x256xbf16, #tpu.memory_space<vmem>>, vector<1x128x256xbf16>
    %99 = vector.shape_cast %98 : vector<1x128x256xbf16> to vector<128x256xbf16>
    %cst_43 = arith.constant dense<0.000000e+00> : vector<16x256xf32>
    %100 = tpu.matmul %97, %99, %cst_43 {dimension_numbers = #tpu.dot_dimension_numbers<[1], [0], [0], [1], [0, 0, 1, 1], [], []>} : vector<16x128xbf16>, vector<128x256xbf16>, vector<16x256xf32> -> vector<16x256xf32>
    %c0_44 = arith.constant 0 : index
    %c0_45 = arith.constant 0 : index
    %c0_46 = arith.constant 0 : index
    %101 = vector.load %arg10[%c0_44, %c0_45, %c0_46] : memref<2x1x256xf32, #tpu.memory_space<vmem>>, vector<1x1x256xf32>
    %102 = vector.shape_cast %101 : vector<1x1x256xf32> to vector<1x256xf32>
    %103 = vector.broadcast %102 : vector<1x256xf32> to vector<16x256xf32>
    %104 = arith.addf %100, %103 : vector<16x256xf32>
    %105 = vector.broadcast %96 : vector<16x1xf32> to vector<16x256xf32>
    %106 = arith.mulf %104, %105 : vector<16x256xf32>
    %cst_47 = arith.constant 0.000000e+00 : f32
    %107 = vector.broadcast %cst_47 : f32 to vector<16x256xf32>
    %108 = arith.maximumf %106, %107 : vector<16x256xf32>
    %109 = arith.truncf %108 : vector<16x256xf32> to vector<16x256xbf16>
    %c0_48 = arith.constant 0 : index
    %c0_49 = arith.constant 0 : index
    %c0_50 = arith.constant 0 : index
    %110 = vector.load %arg11[%c0_48, %c0_49, %c0_50] : memref<2x256x128xbf16, #tpu.memory_space<vmem>>, vector<1x256x128xbf16>
    %111 = vector.shape_cast %110 : vector<1x256x128xbf16> to vector<256x128xbf16>
    %cst_51 = arith.constant dense<0.000000e+00> : vector<16x128xf32>
    %112 = tpu.matmul %109, %111, %cst_51 {dimension_numbers = #tpu.dot_dimension_numbers<[1], [0], [0], [1], [0, 0, 1, 1], [], []>} : vector<16x256xbf16>, vector<256x128xbf16>, vector<16x128xf32> -> vector<16x128xf32>
    %c0_52 = arith.constant 0 : index
    %c0_53 = arith.constant 0 : index
    %c0_54 = arith.constant 0 : index
    %113 = vector.load %arg12[%c0_52, %c0_53, %c0_54] : memref<2x1x128xf32, #tpu.memory_space<vmem>>, vector<1x1x128xf32>
    %114 = vector.shape_cast %113 : vector<1x1x128xf32> to vector<1x128xf32>
    %115 = vector.broadcast %114 : vector<1x128xf32> to vector<16x128xf32>
    %116 = arith.addf %112, %115 : vector<16x128xf32>
    %117 = arith.addf %85, %116 : vector<16x128xf32>
    %c0_55 = arith.constant 0 : index
    %c0_56 = arith.constant 0 : index
    %c0_57 = arith.constant 0 : index
    %118 = vector.load %arg13[%c0_55, %c0_56, %c0_57] : memref<2x1x128xf32, #tpu.memory_space<vmem>>, vector<1x1x128xf32>
    %119 = vector.shape_cast %118 : vector<1x1x128xf32> to vector<1x128xf32>
    %c0_58 = arith.constant 0 : index
    %c0_59 = arith.constant 0 : index
    %c0_60 = arith.constant 0 : index
    %120 = vector.load %arg14[%c0_58, %c0_59, %c0_60] : memref<2x1x128xf32, #tpu.memory_space<vmem>>, vector<1x1x128xf32>
    %121 = vector.shape_cast %120 : vector<1x1x128xf32> to vector<1x128xf32>
    %cst_61 = arith.constant dense<0.000000e+00> : vector<16xf32>
    %122 = vector.multi_reduction <add>, %117, %cst_61 [1] : vector<16x128xf32> to vector<16xf32>
    %123 = vector.shape_cast %122 : vector<16xf32> to vector<16x1xf32>
    %cst_62 = arith.constant 1.280000e+02 : f32
    %124 = vector.broadcast %cst_62 : f32 to vector<16x1xf32>
    %125 = arith.divf %123, %124 : vector<16x1xf32>
    %126 = vector.broadcast %125 : vector<16x1xf32> to vector<16x128xf32>
    %127 = arith.subf %117, %126 : vector<16x128xf32>
    %128 = arith.mulf %127, %127 : vector<16x128xf32>
    %cst_63 = arith.constant dense<0.000000e+00> : vector<16xf32>
    %129 = vector.multi_reduction <add>, %128, %cst_63 [1] : vector<16x128xf32> to vector<16xf32>
    %130 = vector.shape_cast %129 : vector<16xf32> to vector<16x1xf32>
    %cst_64 = arith.constant 1.280000e+02 : f32
    %131 = vector.broadcast %cst_64 : f32 to vector<16x1xf32>
    %132 = arith.divf %130, %131 : vector<16x1xf32>
    %133 = vector.broadcast %125 : vector<16x1xf32> to vector<16x128xf32>
    %134 = arith.subf %117, %133 : vector<16x128xf32>
    %cst_65 = arith.constant 9.99999974E-6 : f32
    %135 = vector.broadcast %cst_65 : f32 to vector<16x1xf32>
    %136 = arith.addf %132, %135 : vector<16x1xf32>
    %137 = math.rsqrt %136 : vector<16x1xf32>
    %138 = vector.broadcast %137 : vector<16x1xf32> to vector<16x128xf32>
    %139 = arith.mulf %134, %138 : vector<16x128xf32>
    %140 = vector.broadcast %119 : vector<1x128xf32> to vector<16x128xf32>
    %141 = arith.mulf %139, %140 : vector<16x128xf32>
    %142 = vector.broadcast %121 : vector<1x128xf32> to vector<16x128xf32>
    %143 = arith.addf %141, %142 : vector<16x128xf32>
    %144 = arith.truncf %143 : vector<16x128xf32> to vector<16x128xbf16>
    %c1 = arith.constant 1 : index
    %c0_66 = arith.constant 0 : index
    %c0_67 = arith.constant 0 : index
    %145 = vector.load %arg2[%c1, %c0_66, %c0_67] : memref<2x128x384xbf16, #tpu.memory_space<vmem>>, vector<1x128x384xbf16>
    %146 = vector.shape_cast %145 : vector<1x128x384xbf16> to vector<128x384xbf16>
    %cst_68 = arith.constant dense<0.000000e+00> : vector<16x384xf32>
    %147 = tpu.matmul %144, %146, %cst_68 {dimension_numbers = #tpu.dot_dimension_numbers<[1], [0], [0], [1], [0, 0, 1, 1], [], []>} : vector<16x128xbf16>, vector<128x384xbf16>, vector<16x384xf32> -> vector<16x384xf32>
    %c1_69 = arith.constant 1 : index
    %c0_70 = arith.constant 0 : index
    %c0_71 = arith.constant 0 : index
    %148 = vector.load %arg3[%c1_69, %c0_70, %c0_71] : memref<2x1x384xf32, #tpu.memory_space<vmem>>, vector<1x1x384xf32>
    %149 = vector.shape_cast %148 : vector<1x1x384xf32> to vector<1x384xf32>
    %150 = vector.broadcast %149 : vector<1x384xf32> to vector<16x384xf32>
    %151 = arith.addf %147, %150 : vector<16x384xf32>
    %152 = vector.extract_strided_slice %151 {offsets = [0, 0], sizes = [16, 64], strides = [1, 1]} : vector<16x384xf32> to vector<16x64xf32>
    %153 = arith.truncf %152 : vector<16x64xf32> to vector<16x64xbf16>
    %154 = vector.extract_strided_slice %151 {offsets = [0, 128], sizes = [16, 64], strides = [1, 1]} : vector<16x384xf32> to vector<16x64xf32>
    %155 = arith.truncf %154 : vector<16x64xf32> to vector<16x64xbf16>
    %156 = vector.extract_strided_slice %151 {offsets = [0, 256], sizes = [16, 64], strides = [1, 1]} : vector<16x384xf32> to vector<16x64xf32>
    %157 = arith.truncf %156 : vector<16x64xf32> to vector<16x64xbf16>
    %cst_72 = arith.constant dense<0.000000e+00> : vector<16x16xf32>
    %158 = tpu.matmul %153, %155, %cst_72 {dimension_numbers = #tpu.dot_dimension_numbers<[1], [1], [0], [0], [0, 0, 1, 0], [], []>} : vector<16x64xbf16>, vector<16x64xbf16>, vector<16x16xf32> -> vector<16x16xf32>
    %159 = arith.addf %158, %1 : vector<16x16xf32>
    %cst_73 = arith.constant dense<0xFF800000> : vector<16xf32>
    %160 = vector.multi_reduction <maximumf>, %159, %cst_73 [1] : vector<16x16xf32> to vector<16xf32>
    %161 = vector.shape_cast %160 : vector<16xf32> to vector<16x1xf32>
    %162 = vector.broadcast %161 : vector<16x1xf32> to vector<16x16xf32>
    %163 = arith.subf %159, %162 : vector<16x16xf32>
    %164 = math.exp %163 : vector<16x16xf32>
    %cst_74 = arith.constant dense<0.000000e+00> : vector<16xf32>
    %165 = vector.multi_reduction <add>, %164, %cst_74 [1] : vector<16x16xf32> to vector<16xf32>
    %166 = vector.shape_cast %165 : vector<16xf32> to vector<16x1xf32>
    %167 = tpu.reciprocal %166 {approx = true} : vector<16x1xf32> -> vector<16x1xf32>
    %168 = vector.broadcast %167 : vector<16x1xf32> to vector<16x16xf32>
    %169 = arith.mulf %164, %168 : vector<16x16xf32>
    %170 = arith.truncf %169 : vector<16x16xf32> to vector<16x16xbf16>
    %cst_75 = arith.constant dense<0.000000e+00> : vector<16x64xf32>
    %171 = tpu.matmul %170, %157, %cst_75 {dimension_numbers = #tpu.dot_dimension_numbers<[1], [0], [0], [1], [0, 0, 1, 1], [], []>} : vector<16x16xbf16>, vector<16x64xbf16>, vector<16x64xf32> -> vector<16x64xf32>
    %172 = vector.extract_strided_slice %151 {offsets = [0, 64], sizes = [16, 64], strides = [1, 1]} : vector<16x384xf32> to vector<16x64xf32>
    %173 = arith.truncf %172 : vector<16x64xf32> to vector<16x64xbf16>
    %174 = vector.extract_strided_slice %151 {offsets = [0, 192], sizes = [16, 64], strides = [1, 1]} : vector<16x384xf32> to vector<16x64xf32>
    %175 = arith.truncf %174 : vector<16x64xf32> to vector<16x64xbf16>
    %176 = vector.extract_strided_slice %151 {offsets = [0, 320], sizes = [16, 64], strides = [1, 1]} : vector<16x384xf32> to vector<16x64xf32>
    %177 = arith.truncf %176 : vector<16x64xf32> to vector<16x64xbf16>
    %cst_76 = arith.constant dense<0.000000e+00> : vector<16x16xf32>
    %178 = tpu.matmul %173, %175, %cst_76 {dimension_numbers = #tpu.dot_dimension_numbers<[1], [1], [0], [0], [0, 0, 1, 0], [], []>} : vector<16x64xbf16>, vector<16x64xbf16>, vector<16x16xf32> -> vector<16x16xf32>
    %179 = arith.addf %178, %1 : vector<16x16xf32>
    %cst_77 = arith.constant dense<0xFF800000> : vector<16xf32>
    %180 = vector.multi_reduction <maximumf>, %179, %cst_77 [1] : vector<16x16xf32> to vector<16xf32>
    %181 = vector.shape_cast %180 : vector<16xf32> to vector<16x1xf32>
    %182 = vector.broadcast %181 : vector<16x1xf32> to vector<16x16xf32>
    %183 = arith.subf %179, %182 : vector<16x16xf32>
    %184 = math.exp %183 : vector<16x16xf32>
    %cst_78 = arith.constant dense<0.000000e+00> : vector<16xf32>
    %185 = vector.multi_reduction <add>, %184, %cst_78 [1] : vector<16x16xf32> to vector<16xf32>
    %186 = vector.shape_cast %185 : vector<16xf32> to vector<16x1xf32>
    %187 = tpu.reciprocal %186 {approx = true} : vector<16x1xf32> -> vector<16x1xf32>
    %188 = vector.broadcast %187 : vector<16x1xf32> to vector<16x16xf32>
    %189 = arith.mulf %184, %188 : vector<16x16xf32>
    %190 = arith.truncf %189 : vector<16x16xf32> to vector<16x16xbf16>
    %cst_79 = arith.constant dense<0.000000e+00> : vector<16x64xf32>
    %191 = tpu.matmul %190, %177, %cst_79 {dimension_numbers = #tpu.dot_dimension_numbers<[1], [0], [0], [1], [0, 0, 1, 1], [], []>} : vector<16x16xbf16>, vector<16x64xbf16>, vector<16x64xf32> -> vector<16x64xf32>
    %192 = tpu.concatenate %171, %191 in 1 : vector<16x64xf32>, vector<16x64xf32> -> vector<16x128xf32>
    %193 = arith.truncf %192 : vector<16x128xf32> to vector<16x128xbf16>
    %c1_80 = arith.constant 1 : index
    %c0_81 = arith.constant 0 : index
    %c0_82 = arith.constant 0 : index
    %194 = vector.load %arg4[%c1_80, %c0_81, %c0_82] : memref<2x128x128xbf16, #tpu.memory_space<vmem>>, vector<1x128x128xbf16>
    %195 = vector.shape_cast %194 : vector<1x128x128xbf16> to vector<128x128xbf16>
    %cst_83 = arith.constant dense<0.000000e+00> : vector<16x128xf32>
    %196 = tpu.matmul %193, %195, %cst_83 {dimension_numbers = #tpu.dot_dimension_numbers<[1], [0], [0], [1], [0, 0, 1, 1], [], []>} : vector<16x128xbf16>, vector<128x128xbf16>, vector<16x128xf32> -> vector<16x128xf32>
    %c1_84 = arith.constant 1 : index
    %c0_85 = arith.constant 0 : index
    %c0_86 = arith.constant 0 : index
    %197 = vector.load %arg5[%c1_84, %c0_85, %c0_86] : memref<2x1x128xf32, #tpu.memory_space<vmem>>, vector<1x1x128xf32>
    %198 = vector.shape_cast %197 : vector<1x1x128xf32> to vector<1x128xf32>
    %199 = vector.broadcast %198 : vector<1x128xf32> to vector<16x128xf32>
    %200 = arith.addf %196, %199 : vector<16x128xf32>
    %201 = arith.addf %143, %200 : vector<16x128xf32>
    %c1_87 = arith.constant 1 : index
    %c0_88 = arith.constant 0 : index
    %c0_89 = arith.constant 0 : index
    %202 = vector.load %arg6[%c1_87, %c0_88, %c0_89] : memref<2x1x128xf32, #tpu.memory_space<vmem>>, vector<1x1x128xf32>
    %203 = vector.shape_cast %202 : vector<1x1x128xf32> to vector<1x128xf32>
    %c1_90 = arith.constant 1 : index
    %c0_91 = arith.constant 0 : index
    %c0_92 = arith.constant 0 : index
    %204 = vector.load %arg7[%c1_90, %c0_91, %c0_92] : memref<2x1x128xf32, #tpu.memory_space<vmem>>, vector<1x1x128xf32>
    %205 = vector.shape_cast %204 : vector<1x1x128xf32> to vector<1x128xf32>
    %cst_93 = arith.constant dense<0.000000e+00> : vector<16xf32>
    %206 = vector.multi_reduction <add>, %201, %cst_93 [1] : vector<16x128xf32> to vector<16xf32>
    %207 = vector.shape_cast %206 : vector<16xf32> to vector<16x1xf32>
    %cst_94 = arith.constant 1.280000e+02 : f32
    %208 = vector.broadcast %cst_94 : f32 to vector<16x1xf32>
    %209 = arith.divf %207, %208 : vector<16x1xf32>
    %210 = vector.broadcast %209 : vector<16x1xf32> to vector<16x128xf32>
    %211 = arith.subf %201, %210 : vector<16x128xf32>
    %212 = arith.mulf %211, %211 : vector<16x128xf32>
    %cst_95 = arith.constant dense<0.000000e+00> : vector<16xf32>
    %213 = vector.multi_reduction <add>, %212, %cst_95 [1] : vector<16x128xf32> to vector<16xf32>
    %214 = vector.shape_cast %213 : vector<16xf32> to vector<16x1xf32>
    %cst_96 = arith.constant 1.280000e+02 : f32
    %215 = vector.broadcast %cst_96 : f32 to vector<16x1xf32>
    %216 = arith.divf %214, %215 : vector<16x1xf32>
    %217 = vector.broadcast %209 : vector<16x1xf32> to vector<16x128xf32>
    %218 = arith.subf %201, %217 : vector<16x128xf32>
    %cst_97 = arith.constant 9.99999974E-6 : f32
    %219 = vector.broadcast %cst_97 : f32 to vector<16x1xf32>
    %220 = arith.addf %216, %219 : vector<16x1xf32>
    %221 = math.rsqrt %220 : vector<16x1xf32>
    %222 = vector.broadcast %221 : vector<16x1xf32> to vector<16x128xf32>
    %223 = arith.mulf %218, %222 : vector<16x128xf32>
    %224 = vector.broadcast %203 : vector<1x128xf32> to vector<16x128xf32>
    %225 = arith.mulf %223, %224 : vector<16x128xf32>
    %226 = vector.broadcast %205 : vector<1x128xf32> to vector<16x128xf32>
    %227 = arith.addf %225, %226 : vector<16x128xf32>
    %c1_98 = arith.constant 1 : index
    %c0_99 = arith.constant 0 : index
    %c0_100 = arith.constant 0 : index
    %228 = vector.load %arg8[%c1_98, %c0_99, %c0_100] : memref<2x1x128xf32, #tpu.memory_space<vmem>>, vector<1x1x128xf32>
    %229 = vector.shape_cast %228 : vector<1x1x128xf32> to vector<1x128xf32>
    %230 = vector.broadcast %229 : vector<1x128xf32> to vector<16x128xf32>
    %231 = arith.mulf %227, %230 : vector<16x128xf32>
    %cst_101 = arith.constant dense<0.000000e+00> : vector<16xf32>
    %232 = vector.multi_reduction <add>, %231, %cst_101 [1] : vector<16x128xf32> to vector<16xf32>
    %233 = vector.shape_cast %232 : vector<16xf32> to vector<16x1xf32>
    %234 = arith.negf %233 : vector<16x1xf32>
    %235 = math.exp %234 : vector<16x1xf32>
    %cst_102 = arith.constant 1.000000e+00 : f32
    %236 = vector.broadcast %cst_102 : f32 to vector<16x1xf32>
    %237 = arith.addf %236, %235 : vector<16x1xf32>
    %238 = arith.divf %236, %237 : vector<16x1xf32>
    %239 = arith.truncf %227 : vector<16x128xf32> to vector<16x128xbf16>
    %c1_103 = arith.constant 1 : index
    %c0_104 = arith.constant 0 : index
    %c0_105 = arith.constant 0 : index
    %240 = vector.load %arg9[%c1_103, %c0_104, %c0_105] : memref<2x128x256xbf16, #tpu.memory_space<vmem>>, vector<1x128x256xbf16>
    %241 = vector.shape_cast %240 : vector<1x128x256xbf16> to vector<128x256xbf16>
    %cst_106 = arith.constant dense<0.000000e+00> : vector<16x256xf32>
    %242 = tpu.matmul %239, %241, %cst_106 {dimension_numbers = #tpu.dot_dimension_numbers<[1], [0], [0], [1], [0, 0, 1, 1], [], []>} : vector<16x128xbf16>, vector<128x256xbf16>, vector<16x256xf32> -> vector<16x256xf32>
    %c1_107 = arith.constant 1 : index
    %c0_108 = arith.constant 0 : index
    %c0_109 = arith.constant 0 : index
    %243 = vector.load %arg10[%c1_107, %c0_108, %c0_109] : memref<2x1x256xf32, #tpu.memory_space<vmem>>, vector<1x1x256xf32>
    %244 = vector.shape_cast %243 : vector<1x1x256xf32> to vector<1x256xf32>
    %245 = vector.broadcast %244 : vector<1x256xf32> to vector<16x256xf32>
    %246 = arith.addf %242, %245 : vector<16x256xf32>
    %247 = vector.broadcast %238 : vector<16x1xf32> to vector<16x256xf32>
    %248 = arith.mulf %246, %247 : vector<16x256xf32>
    %cst_110 = arith.constant 0.000000e+00 : f32
    %249 = vector.broadcast %cst_110 : f32 to vector<16x256xf32>
    %250 = arith.maximumf %248, %249 : vector<16x256xf32>
    %251 = arith.truncf %250 : vector<16x256xf32> to vector<16x256xbf16>
    %c1_111 = arith.constant 1 : index
    %c0_112 = arith.constant 0 : index
    %c0_113 = arith.constant 0 : index
    %252 = vector.load %arg11[%c1_111, %c0_112, %c0_113] : memref<2x256x128xbf16, #tpu.memory_space<vmem>>, vector<1x256x128xbf16>
    %253 = vector.shape_cast %252 : vector<1x256x128xbf16> to vector<256x128xbf16>
    %cst_114 = arith.constant dense<0.000000e+00> : vector<16x128xf32>
    %254 = tpu.matmul %251, %253, %cst_114 {dimension_numbers = #tpu.dot_dimension_numbers<[1], [0], [0], [1], [0, 0, 1, 1], [], []>} : vector<16x256xbf16>, vector<256x128xbf16>, vector<16x128xf32> -> vector<16x128xf32>
    %c1_115 = arith.constant 1 : index
    %c0_116 = arith.constant 0 : index
    %c0_117 = arith.constant 0 : index
    %255 = vector.load %arg12[%c1_115, %c0_116, %c0_117] : memref<2x1x128xf32, #tpu.memory_space<vmem>>, vector<1x1x128xf32>
    %256 = vector.shape_cast %255 : vector<1x1x128xf32> to vector<1x128xf32>
    %257 = vector.broadcast %256 : vector<1x128xf32> to vector<16x128xf32>
    %258 = arith.addf %254, %257 : vector<16x128xf32>
    %259 = arith.addf %227, %258 : vector<16x128xf32>
    %c1_118 = arith.constant 1 : index
    %c0_119 = arith.constant 0 : index
    %c0_120 = arith.constant 0 : index
    %260 = vector.load %arg13[%c1_118, %c0_119, %c0_120] : memref<2x1x128xf32, #tpu.memory_space<vmem>>, vector<1x1x128xf32>
    %261 = vector.shape_cast %260 : vector<1x1x128xf32> to vector<1x128xf32>
    %c1_121 = arith.constant 1 : index
    %c0_122 = arith.constant 0 : index
    %c0_123 = arith.constant 0 : index
    %262 = vector.load %arg14[%c1_121, %c0_122, %c0_123] : memref<2x1x128xf32, #tpu.memory_space<vmem>>, vector<1x1x128xf32>
    %263 = vector.shape_cast %262 : vector<1x1x128xf32> to vector<1x128xf32>
    %cst_124 = arith.constant dense<0.000000e+00> : vector<16xf32>
    %264 = vector.multi_reduction <add>, %259, %cst_124 [1] : vector<16x128xf32> to vector<16xf32>
    %265 = vector.shape_cast %264 : vector<16xf32> to vector<16x1xf32>
    %cst_125 = arith.constant 1.280000e+02 : f32
    %266 = vector.broadcast %cst_125 : f32 to vector<16x1xf32>
    %267 = arith.divf %265, %266 : vector<16x1xf32>
    %268 = vector.broadcast %267 : vector<16x1xf32> to vector<16x128xf32>
    %269 = arith.subf %259, %268 : vector<16x128xf32>
    %270 = arith.mulf %269, %269 : vector<16x128xf32>
    %cst_126 = arith.constant dense<0.000000e+00> : vector<16xf32>
    %271 = vector.multi_reduction <add>, %270, %cst_126 [1] : vector<16x128xf32> to vector<16xf32>
    %272 = vector.shape_cast %271 : vector<16xf32> to vector<16x1xf32>
    %cst_127 = arith.constant 1.280000e+02 : f32
    %273 = vector.broadcast %cst_127 : f32 to vector<16x1xf32>
    %274 = arith.divf %272, %273 : vector<16x1xf32>
    %275 = vector.broadcast %267 : vector<16x1xf32> to vector<16x128xf32>
    %276 = arith.subf %259, %275 : vector<16x128xf32>
    %cst_128 = arith.constant 9.99999974E-6 : f32
    %277 = vector.broadcast %cst_128 : f32 to vector<16x1xf32>
    %278 = arith.addf %274, %277 : vector<16x1xf32>
    %279 = math.rsqrt %278 : vector<16x1xf32>
    %280 = vector.broadcast %279 : vector<16x1xf32> to vector<16x128xf32>
    %281 = arith.mulf %276, %280 : vector<16x128xf32>
    %282 = vector.broadcast %261 : vector<1x128xf32> to vector<16x128xf32>
    %283 = arith.mulf %281, %282 : vector<16x128xf32>
    %284 = vector.broadcast %263 : vector<1x128xf32> to vector<16x128xf32>
    %285 = arith.addf %283, %284 : vector<16x128xf32>
    %c0_129 = arith.constant 0 : index
    %c0_130 = arith.constant 0 : index
    %286 = vector.load %arg15[%c0_129, %c0_130] : memref<16x128xf32, #tpu.memory_space<vmem>>, vector<16x128xf32>
    tpu.vector_store %arg15[%c0_129, %c0_130], %285 {strides = array<i32>} : memref<16x128xf32, #tpu.memory_space<vmem>>, vector<16x128xf32>,
    return
  }
}

</mosaic_0001>

<llo_original>
// kernel: tpu_custom_call.1
$region0: #{tpu_custom_call.1}
  #allocation0 [shape = 'u32[]', space=smem, size = 0x4, offset = 0x4, fixed_abs, tag = 'smem constant byte address 0x4 - core index']
  #allocation1 [shape = 'u32[72,128]{1,0:T(1,128)}', space=vmem, size = 0x9000, scoped, tag = 'internal scratch']
  %s0 = inlined_call_operand.hbm [shape: f32[16,128], index: 0, kind: input, shape index: {}]
  %s1 = inlined_call_operand.hbm [shape: f32[16,16], index: 1, kind: input, shape index: {}]
  %s2 = inlined_call_operand.hbm [shape: bf16[2,128,384], index: 2, kind: input, shape index: {}]
  %s3 = inlined_call_operand.hbm [shape: f32[2,1,384], index: 3, kind: input, shape index: {}]
  %s4 = inlined_call_operand.hbm [shape: bf16[2,128,128], index: 4, kind: input, shape index: {}]
  %s5 = inlined_call_operand.vmem [shape: f32[2,1,128], index: 5, kind: input, shape index: {}]
  %s6 = inlined_call_operand.hbm [shape: f32[2,1,128], index: 6, kind: input, shape index: {}]
  %s7 = inlined_call_operand.hbm [shape: f32[2,1,128], index: 7, kind: input, shape index: {}]
  %s8 = inlined_call_operand.hbm [shape: f32[2,1,128], index: 8, kind: input, shape index: {}]
  %s9 = inlined_call_operand.hbm [shape: bf16[2,128,256], index: 9, kind: input, shape index: {}]
  %s10 = inlined_call_operand.vmem [shape: f32[2,1,256], index: 10, kind: input, shape index: {}]
  %s11 = inlined_call_operand.hbm [shape: bf16[2,256,128], index: 11, kind: input, shape index: {}]
  %s12 = inlined_call_operand.vmem [shape: f32[2,1,128], index: 12, kind: input, shape index: {}]
  %s13 = inlined_call_operand.vmem [shape: f32[2,1,128], index: 13, kind: input, shape index: {}]
  %s14 = inlined_call_operand.vmem [shape: f32[2,1,128], index: 14, kind: input, shape index: {}]
  %s15 = inlined_call_operand.hbm [shape: f32[16,128], index: 15, kind: output, shape index: {}]
  %s16 = sld [smem:[#allocation0]]
  $region110: #{tpu_custom_call.1} parent=0
    _
  %s18 = ssub.s32 1, %s16
  %s19 = scalar_select 0, %s18, %s16
  $region1: #{tpu_custom_call.1} parent=0
    #allocation2 [shape = 'u8[8192]{0}', space=vmem, size = 0x2000, scoped, tag = 'input window, operand 0, single buffered']
    #allocation3 [shape = 's32[1]{0}', space=sflag, size = 0x4, scoped, tag = 'scoped memory for tpu_custom_call.1']
    #allocation4 [shape = 's32[1]{0}', space=sflag, size = 0x4, scoped, tag = 'scoped memory for tpu_custom_call.1']
    #allocation5 [shape = 'u8[8192]{0}', space=vmem, size = 0x2000, scoped, tag = 'input window, operand 1, single buffered']
    #allocation6 [shape = 's32[1]{0}', space=sflag, size = 0x4, scoped, tag = 'scoped memory for tpu_custom_call.1']
    #allocation7 [shape = 'u8[196608]{0}', space=vmem, size = 0x30000, scoped, tag = 'input window, operand 2, single buffered']
    #allocation8 [shape = 'u8[3072]{0}', space=vmem, size = 0xc00, scoped, tag = 'input window, operand 3, single buffered']
    #allocation9 [shape = 's32[1]{0}', space=sflag, size = 0x4, scoped, tag = 'scoped memory for tpu_custom_call.1']
    #allocation10 [shape = 'u8[65536]{0}', space=vmem, size = 0x10000, scoped, tag = 'input window, operand 4, single buffered']
    #allocation11 [shape = 'u8[1024]{0}', space=vmem, size = 0x400, scoped, tag = 'input window, operand 6, single buffered']
    #allocation12 [shape = 's32[1]{0}', space=sflag, size = 0x4, scoped, tag = 'scoped memory for tpu_custom_call.1']
    #allocation13 [shape = 'u8[1024]{0}', space=vmem, size = 0x400, scoped, tag = 'input window, operand 7, single buffered']
    #allocation14 [shape = 'u8[1024]{0}', space=vmem, size = 0x400, scoped, tag = 'input window, operand 8, single buffered']
    #allocation15 [shape = 's32[1]{0}', space=sflag, size = 0x4, scoped, tag = 'scoped memory for tpu_custom_call.1']
    #allocation16 [shape = 'u8[131072]{0}', space=vmem, size = 0x20000, scoped, tag = 'input window, operand 9, single buffered']
    #allocation17 [shape = 'u8[131072]{0}', space=vmem, size = 0x20000, scoped, tag = 'input window, operand 11, single buffered']
    #allocation18 [shape = 's32[1]{0}', space=sflag, size = 0x4, scoped, tag = 'scoped memory for tpu_custom_call.1']
    #allocation19 [shape = 'u8[8192]{0}', space=vmem, size = 0x2000, scoped, tag = 'output window, operand 0, single buffered']
    %20 = vsyncpa [#allocation3], 0
    %21 = vsyncpa [#allocation6], 0
    %22 = vsyncpa [#allocation9], 0
    %23 = vsyncpa [#allocation12], 0
    %24 = vsyncpa [#allocation15], 0
    %25 = vsyncpa [#allocation18], 0
    %26 = vsyncpa [#allocation4], 0
    // Predicated region
    $region2: #{tpu_custom_call.1} parent=1 // pred_check
      _
    $region3: #{tpu_custom_call.1} parent=1 // pred_check_branch
      %28 = sbr.rel (0) target = $region5
    $region4: #{tpu_custom_call.1} parent=1 // pred_region
      %30 = vsyncadd [#allocation3], 0
      %s31 = sshll.u32 %s0, 4
      %s32 = int_to_ptr.hbm [resolvable:$true] %s31
      %s33 = sshll.u32 [#allocation2], 4
      %s34 = int_to_ptr.vmem [resolvable:$true] %s33
      %39 = dma.hbm_to_vmem [thread:$0]  %s32, 256, %s34, [#allocation3], 128, 128, 8
    $region5: #{tpu_custom_call.1} parent=1 // pred_fallthru
      _
    // Predicated region
    $region6: #{tpu_custom_call.1} parent=1 // pred_check
      _
    $region7: #{tpu_custom_call.1} parent=1 // pred_check_branch
      %41 = sbr.rel (0) target = $region9
    $region8: #{tpu_custom_call.1} parent=1 // pred_region
      %43 = vsyncadd [#allocation6], 0
      %s44 = sshll.u32 %s1, 4
      %s45 = int_to_ptr.hbm [resolvable:$true] %s44
      %s46 = sshll.u32 [#allocation5], 4
      %s47 = int_to_ptr.vmem [resolvable:$true] %s46
      %52 = dma.hbm_to_vmem [thread:$0]  %s45, 256, %s47, [#allocation6], 128, 128, 8
    $region9: #{tpu_custom_call.1} parent=1 // pred_fallthru
      _
    // Predicated region
    $region10: #{tpu_custom_call.1} parent=1 // pred_check
      _
    $region11: #{tpu_custom_call.1} parent=1 // pred_check_branch
      %54 = sbr.rel (0) target = $region13
    $region12: #{tpu_custom_call.1} parent=1 // pred_region
      %56 = vsyncadd [#allocation6], 0
      %s57 = sshll.u32 %s2, 4
      %s58 = int_to_ptr.hbm [resolvable:$true] %s57
      %s59 = sshll.u32 [#allocation7], 4
      %s60 = int_to_ptr.vmem [resolvable:$true] %s59
      %65 = dma.hbm_to_vmem [thread:$0]  %s58, 6144, %s60, [#allocation6], 192, 192, 12
    $region13: #{tpu_custom_call.1} parent=1 // pred_fallthru
      _
    // Predicated region
    $region14: #{tpu_custom_call.1} parent=1 // pred_check
      _
    $region15: #{tpu_custom_call.1} parent=1 // pred_check_branch
      %67 = sbr.rel (0) target = $region17
    $region16: #{tpu_custom_call.1} parent=1 // pred_region
      %69 = vsyncadd [#allocation9], 0
      %s70 = sshll.u32 %s3, 4
      %s71 = int_to_ptr.hbm [resolvable:$true] %s70
      %s72 = sshll.u32 [#allocation8], 4
      %s73 = int_to_ptr.vmem [resolvable:$true] %s72
      %78 = dma.hbm_to_vmem [thread:$0]  %s71, 96, %s73, [#allocation9], 48, 48, 3
    $region17: #{tpu_custom_call.1} parent=1 // pred_fallthru
      _
    // Predicated region
    $region18: #{tpu_custom_call.1} parent=1 // pred_check
      _
    $region19: #{tpu_custom_call.1} parent=1 // pred_check_branch
      %80 = sbr.rel (0) target = $region21
    $region20: #{tpu_custom_call.1} parent=1 // pred_region
      %82 = vsyncadd [#allocation9], 0
      %s83 = sshll.u32 %s4, 4
      %s84 = int_to_ptr.hbm [resolvable:$true] %s83
      %s85 = sshll.u32 [#allocation10], 4
      %s86 = int_to_ptr.vmem [resolvable:$true] %s85
      %91 = dma.hbm_to_vmem [thread:$0]  %s84, 2048, %s86, [#allocation9], 64, 64, 4
    $region21: #{tpu_custom_call.1} parent=1 // pred_fallthru
      _
    // Predicated region
    $region22: #{tpu_custom_call.1} parent=1 // pred_check
      _
    $region23: #{tpu_custom_call.1} parent=1 // pred_check_branch
      %93 = sbr.rel (0) target = $region25
    $region24: #{tpu_custom_call.1} parent=1 // pred_region
      _
    $region25: #{tpu_custom_call.1} parent=1 // pred_fallthru
      _
    // Predicated region
    $region26: #{tpu_custom_call.1} parent=1 // pred_check
      _
    $region27: #{tpu_custom_call.1} parent=1 // pred_check_branch
      %95 = sbr.rel (0) target = $region29
    $region28: #{tpu_custom_call.1} parent=1 // pred_region
      %97 = vsyncadd [#allocation12], 0
      %s98 = sshll.u32 %s6, 4
      %s99 = int_to_ptr.hbm [resolvable:$true] %s98
      %s100 = sshll.u32 [#allocation11], 4
      %s101 = int_to_ptr.vmem [resolvable:$true] %s100
      %106 = dma.hbm_to_vmem [thread:$0]  %s99, 32, %s101, [#allocation12], 16, 16, 1
    $region29: #{tpu_custom_call.1} parent=1 // pred_fallthru
      _
    // Predicated region
    $region30: #{tpu_custom_call.1} parent=1 // pred_check
      _
    $region31: #{tpu_custom_call.1} parent=1 // pred_check_branch
      %108 = sbr.rel (0) target = $region33
    $region32: #{tpu_custom_call.1} parent=1 // pred_region
      %110 = vsyncadd [#allocation12], 0
      %s111 = sshll.u32 %s7, 4
      %s112 = int_to_ptr.hbm [resolvable:$true] %s111
      %s113 = sshll.u32 [#allocation13], 4
      %s114 = int_to_ptr.vmem [resolvable:$true] %s113
      %119 = dma.hbm_to_vmem [thread:$0]  %s112, 32, %s114, [#allocation12], 16, 16, 1
    $region33: #{tpu_custom_call.1} parent=1 // pred_fallthru
      _
    // Predicated region
    $region34: #{tpu_custom_call.1} parent=1 // pred_check
      _
    $region35: #{tpu_custom_call.1} parent=1 // pred_check_branch
      %121 = sbr.rel (0) target = $region37
    $region36: #{tpu_custom_call.1} parent=1 // pred_region
      %123 = vsyncadd [#allocation15], 0
      %s124 = sshll.u32 %s8, 4
      %s125 = int_to_ptr.hbm [resolvable:$true] %s124
      %s126 = sshll.u32 [#allocation14], 4
      %s127 = int_to_ptr.vmem [resolvable:$true] %s126
      %132 = dma.hbm_to_vmem [thread:$0]  %s125, 32, %s127, [#allocation15], 16, 16, 1
    $region37: #{tpu_custom_call.1} parent=1 // pred_fallthru
      _
    // Predicated region
    $region38: #{tpu_custom_call.1} parent=1 // pred_check
      _
    $region39: #{tpu_custom_call.1} parent=1 // pred_check_branch
      %134 = sbr.rel (0) target = $region41
    $region40: #{tpu_custom_call.1} parent=1 // pred_region
      %136 = vsyncadd [#allocation15], 0
      %s137 = sshll.u32 %s9, 4
      %s138 = int_to_ptr.hbm [resolvable:$true] %s137
      %s139 = sshll.u32 [#allocation16], 4
      %s140 = int_to_ptr.vmem [resolvable:$true] %s139
      %145 = dma.hbm_to_vmem [thread:$0]  %s138, 4096, %s140, [#allocation15], 128, 128, 8
    $region41: #{tpu_custom_call.1} parent=1 // pred_fallthru
      _
    // Predicated region
    $region42: #{tpu_custom_call.1} parent=1 // pred_check
      _
    $region43: #{tpu_custom_call.1} parent=1 // pred_check_branch
      %147 = sbr.rel (0) target = $region45
    $region44: #{tpu_custom_call.1} parent=1 // pred_region
      _
    $region45: #{tpu_custom_call.1} parent=1 // pred_fallthru
      _
    // Predicated region
    $region46: #{tpu_custom_call.1} parent=1 // pred_check
      _
    $region47: #{tpu_custom_call.1} parent=1 // pred_check_branch
      %149 = sbr.rel (0) target = $region49
    $region48: #{tpu_custom_call.1} parent=1 // pred_region
      %151 = vsyncadd [#allocation18], 0
      %s152 = sshll.u32 %s11, 4
      %s153 = int_to_ptr.hbm [resolvable:$true] %s152
      %s154 = sshll.u32 [#allocation17], 4
      %s155 = int_to_ptr.vmem [resolvable:$true] %s154
      %160 = dma.hbm_to_vmem [thread:$0]  %s153, 4096, %s155, [#allocation18], 64, 64, 4
    $region49: #{tpu_custom_call.1} parent=1 // pred_fallthru
      _
    // Predicated region
    $region50: #{tpu_custom_call.1} parent=1 // pred_check
      _
    $region51: #{tpu_custom_call.1} parent=1 // pred_check_branch
      %162 = sbr.rel (0) target = $region53
    $region52: #{tpu_custom_call.1} parent=1 // pred_region
      _
    $region53: #{tpu_custom_call.1} parent=1 // pred_fallthru
      _
    // Predicated region
    $region54: #{tpu_custom_call.1} parent=1 // pred_check
      _
    $region55: #{tpu_custom_call.1} parent=1 // pred_check_branch
      %164 = sbr.rel (0) target = $region57
    $region56: #{tpu_custom_call.1} parent=1 // pred_region
      _
    $region57: #{tpu_custom_call.1} parent=1 // pred_fallthru
      _
    // Predicated region
    $region58: #{tpu_custom_call.1} parent=1 // pred_check
      _
    $region59: #{tpu_custom_call.1} parent=1 // pred_check_branch
      %166 = sbr.rel (0) target = $region61
    $region60: #{tpu_custom_call.1} parent=1 // pred_region
      _
    $region61: #{tpu_custom_call.1} parent=1 // pred_fallthru
      _
    // Predicated region
    $region62: #{tpu_custom_call.1} parent=1 // pred_check
      _
    $region63: #{tpu_custom_call.1} parent=1 // pred_check_branch
      %168 = sbr.rel (0) target = $region65
    $region64: #{tpu_custom_call.1} parent=1 // pred_region
      %170 = dma.done [#allocation3], 256
    $region65: #{tpu_custom_call.1} parent=1 // pred_fallthru
      _
    // Predicated region
    $region66: #{tpu_custom_call.1} parent=1 // pred_check
      _
    $region67: #{tpu_custom_call.1} parent=1 // pred_check_branch
      %172 = sbr.rel (0) target = $region69
    $region68: #{tpu_custom_call.1} parent=1 // pred_region
      %174 = dma.done [#allocation6], 256
    $region69: #{tpu_custom_call.1} parent=1 // pred_fallthru
      _
    // Predicated region
    $region70: #{tpu_custom_call.1} parent=1 // pred_check
      _
    $region71: #{tpu_custom_call.1} parent=1 // pred_check_branch
      %176 = sbr.rel (0) target = $region73
    $region72: #{tpu_custom_call.1} parent=1 // pred_region
      %178 = dma.done [#allocation6], 6144
    $region73: #{tpu_custom_call.1} parent=1 // pred_fallthru
      _
    // Predicated region
    $region74: #{tpu_custom_call.1} parent=1 // pred_check
      _
    $region75: #{tpu_custom_call.1} parent=1 // pred_check_branch
      %180 = sbr.rel (0) target = $region77
    $region76: #{tpu_custom_call.1} parent=1 // pred_region
      %182 = dma.done [#allocation9], 96
    $region77: #{tpu_custom_call.1} parent=1 // pred_fallthru
      _
    // Predicated region
    $region78: #{tpu_custom_call.1} parent=1 // pred_check
      _
    $region79: #{tpu_custom_call.1} parent=1 // pred_check_branch
      %184 = sbr.rel (0) target = $region81
    $region80: #{tpu_custom_call.1} parent=1 // pred_region
      %186 = dma.done [#allocation9], 2048
    $region81: #{tpu_custom_call.1} parent=1 // pred_fallthru
      _
    // Predicated region
    $region82: #{tpu_custom_call.1} parent=1 // pred_check
      _
    $region83: #{tpu_custom_call.1} parent=1 // pred_check_branch
      %188 = sbr.rel (0) target = $region85
    $region84: #{tpu_custom_call.1} parent=1 // pred_region
      %190 = dma.done [#allocation12], 32
    $region85: #{tpu_custom_call.1} parent=1 // pred_fallthru
      _
    // Predicated region
    $region86: #{tpu_custom_call.1} parent=1 // pred_check
      _
    $region87: #{tpu_custom_call.1} parent=1 // pred_check_branch
      %192 = sbr.rel (0) target = $region89
    $region88: #{tpu_custom_call.1} parent=1 // pred_region
      %194 = dma.done [#allocation12], 32
    $region89: #{tpu_custom_call.1} parent=1 // pred_fallthru
      _
    // Predicated region
    $region90: #{tpu_custom_call.1} parent=1 // pred_check
      _
    $region91: #{tpu_custom_call.1} parent=1 // pred_check_branch
      %196 = sbr.rel (0) target = $region93
    $region92: #{tpu_custom_call.1} parent=1 // pred_region
      %198 = dma.done [#allocation15], 32
    $region93: #{tpu_custom_call.1} parent=1 // pred_fallthru
      _
    // Predicated region
    $region94: #{tpu_custom_call.1} parent=1 // pred_check
      _
    $region95: #{tpu_custom_call.1} parent=1 // pred_check_branch
      %200 = sbr.rel (0) target = $region97
    $region96: #{tpu_custom_call.1} parent=1 // pred_region
      %202 = dma.done [#allocation15], 4096
    $region97: #{tpu_custom_call.1} parent=1 // pred_fallthru
      _
    // Predicated region
    $region98: #{tpu_custom_call.1} parent=1 // pred_check
      _
    $region99: #{tpu_custom_call.1} parent=1 // pred_check_branch
      %204 = sbr.rel (0) target = $region101
    $region100: #{tpu_custom_call.1} parent=1 // pred_region
      %206 = dma.done [#allocation18], 4096
    $region101: #{tpu_custom_call.1} parent=1 // pred_fallthru
      _
    %v208 = vld [vmem:[#allocation2] sm:$0xff]
    %v209 = vld [vmem:[#allocation2 + $0x8] sm:$0xff]
    %v210 = vld [vmem:[#allocation5] sm:$0xff]
    %v211 = vld [vmem:[#allocation5 + $0x8] sm:$0xff]
    %v212 = vpack.c.bf16 %v209, %v208
    %v213 = vld [vmem:[#allocation7] sm:$0xff]
    %v214 = vld [vmem:[#allocation7 + $0x8] sm:$0xf]
    %v215 = vld [vmem:[#allocation7 + $0xc] sm:$0xff]
    %v216 = vld [vmem:[#allocation7 + $0x14] sm:$0xf]
    %v217 = vld [vmem:[#allocation7 + $0x18] sm:$0xff]
    %v218 = vld [vmem:[#allocation7 + $0x20] sm:$0xf]
    %v219 = vld [vmem:[#allocation7 + $0x24] sm:$0xff]
    %v220 = vld [vmem:[#allocation7 + $0x2c] sm:$0xf]
    %v221 = vld [vmem:[#allocation7 + $0x30] sm:$0xff]
    %v222 = vld [vmem:[#allocation7 + $0x38] sm:$0xf]
    %v223 = vld [vmem:[#allocation7 + $0x3c] sm:$0xff]
    %v224 = vld [vmem:[#allocation7 + $0x44] sm:$0xf]
    %v225 = vld [vmem:[#allocation7 + $0x48] sm:$0xff]
    %v226 = vld [vmem:[#allocation7 + $0x50] sm:$0xf]
    %v227 = vld [vmem:[#allocation7 + $0x54] sm:$0xff]
    %v228 = vld [vmem:[#allocation7 + $0x5c] sm:$0xf]
    %v229 = vld [vmem:[#allocation7 + $0x60] sm:$0xff]
    %v230 = vld [vmem:[#allocation7 + $0x68] sm:$0xf]
    %v231 = vld [vmem:[#allocation7 + $0x6c] sm:$0xff]
    %v232 = vld [vmem:[#allocation7 + $0x74] sm:$0xf]
    %v233 = vld [vmem:[#allocation7 + $0x78] sm:$0xff]
    %v234 = vld [vmem:[#allocation7 + $0x80] sm:$0xf]
    %v235 = vld [vmem:[#allocation7 + $0x84] sm:$0xff]
    %v236 = vld [vmem:[#allocation7 + $0x8c] sm:$0xf]
    %v237 = vld [vmem:[#allocation7 + $0x90] sm:$0xff]
    %v238 = vld [vmem:[#allocation7 + $0x98] sm:$0xf]
    %v239 = vld [vmem:[#allocation7 + $0x9c] sm:$0xff]
    %v240 = vld [vmem:[#allocation7 + $0xa4] sm:$0xf]
    %v241 = vld [vmem:[#allocation7 + $0xa8] sm:$0xff]
    %v242 = vld [vmem:[#allocation7 + $0xb0] sm:$0xf]
    %v243 = vld [vmem:[#allocation7 + $0xb4] sm:$0xff]
    %v244 = vld [vmem:[#allocation7 + $0xbc] sm:$0xf]
    %v245 = vld [vmem:[#allocation8] sm:$0x7]
    %v247 = vperm.slane %v245, 0
    %v248 = vperm.slane %v245, 1
    %v249 = vperm.slane %v245, 2
    %v285 = vunpack.c.l.b16 %v213
    %v286 = vunpack.c.h.b16 %v213
    %v287 = vunpack.c.l.b16 %v214
    %v288 = vunpack.c.l.b16 %v215
    %v289 = vunpack.c.h.b16 %v215
    %v290 = vunpack.c.l.b16 %v216
    %v291 = vunpack.c.l.b16 %v217
    %v292 = vunpack.c.h.b16 %v217
    %v293 = vunpack.c.l.b16 %v218
    %v294 = vunpack.c.l.b16 %v219
    %v295 = vunpack.c.h.b16 %v219
    %v296 = vunpack.c.l.b16 %v220
    %v297 = vunpack.c.l.b16 %v221
    %v298 = vunpack.c.h.b16 %v221
    %v299 = vunpack.c.l.b16 %v222
    %v300 = vunpack.c.l.b16 %v223
    %v301 = vunpack.c.h.b16 %v223
    %v302 = vunpack.c.l.b16 %v224
    %v303 = vunpack.c.l.b16 %v225
    %v304 = vunpack.c.h.b16 %v225
    %v305 = vunpack.c.l.b16 %v226
    %v306 = vunpack.c.l.b16 %v227
    %v307 = vunpack.c.h.b16 %v227
    %v308 = vunpack.c.l.b16 %v228
    %v309 = vunpack.c.l.b16 %v229
    %v310 = vunpack.c.h.b16 %v229
    %v311 = vunpack.c.l.b16 %v230
    %v312 = vunpack.c.l.b16 %v231
    %v313 = vunpack.c.h.b16 %v231
    %v314 = vunpack.c.l.b16 %v232
    %v315 = vunpack.c.l.b16 %v233
    %v316 = vunpack.c.h.b16 %v233
    %v317 = vunpack.c.l.b16 %v234
    %v318 = vunpack.c.l.b16 %v235
    %v319 = vunpack.c.h.b16 %v235
    %v320 = vunpack.c.l.b16 %v236
    %v321 = vunpack.c.l.b16 %v237
    %v322 = vunpack.c.h.b16 %v237
    %v323 = vunpack.c.l.b16 %v238
    %v324 = vunpack.c.l.b16 %v239
    %v325 = vunpack.c.h.b16 %v239
    %v326 = vunpack.c.l.b16 %v240
    %v327 = vunpack.c.l.b16 %v241
    %v328 = vunpack.c.h.b16 %v241
    %v329 = vunpack.c.l.b16 %v242
    %v330 = vunpack.c.l.b16 %v243
    %v331 = vunpack.c.h.b16 %v243
    %v332 = vunpack.c.l.b16 %v244
    %v333 = vpack.c.b16 %v288, %v285
    %v334 = vpack.c.b16 %v289, %v286
    %v335 = vpack.c.b16 %v290, %v287
    %v336 = vpack.c.b16 %v294, %v291
    %v337 = vpack.c.b16 %v295, %v292
    %v338 = vpack.c.b16 %v296, %v293
    %v339 = vpack.c.b16 %v300, %v297
    %v340 = vpack.c.b16 %v301, %v298
    %v341 = vpack.c.b16 %v302, %v299
    %v342 = vpack.c.b16 %v306, %v303
    %v343 = vpack.c.b16 %v307, %v304
    %v344 = vpack.c.b16 %v308, %v305
    %v345 = vpack.c.b16 %v312, %v309
    %v346 = vpack.c.b16 %v313, %v310
    %v347 = vpack.c.b16 %v314, %v311
    %v348 = vpack.c.b16 %v318, %v315
    %v349 = vpack.c.b16 %v319, %v316
    %v350 = vpack.c.b16 %v320, %v317
    %v351 = vpack.c.b16 %v324, %v321
    %v352 = vpack.c.b16 %v325, %v322
    %v353 = vpack.c.b16 %v326, %v323
    %v354 = vpack.c.b16 %v330, %v327
    %v355 = vpack.c.b16 %v331, %v328
    %v356 = vpack.c.b16 %v332, %v329
    %381 = vmatpush.bf16.msra.mxu0 %v354
    %382 = vmatpush.bf16.msra.mxu0 %v351
    %383 = vmatpush.bf16.msra.mxu0 %v348
    %384 = vmatpush.bf16.msra.mxu0 %v345
    %385 = vmatpush.bf16.msra.mxu0 %v342
    %386 = vmatpush.bf16.msra.mxu0 %v339
    %387 = vmatpush.bf16.msra.mxu0 %v336
    %388 = vmatpush.bf16.msra.mxu0 %v333
    %389 = vmatmul.bf16.gmra.mxu0 %v212
    %v390 = vpop.f32.mrf.mxu0
    %v391 = vadd.f32 %v247, %v390
    %v392 = vpop.f32.mrf.mxu0
    %v393 = vadd.f32 %v247, %v392
    %394 = vdwg.mxu0
    %395 = vmatpush.bf16.msra.mxu0 %v355
    %396 = vmatpush.bf16.msra.mxu0 %v352
    %397 = vmatpush.bf16.msra.mxu0 %v349
    %398 = vmatpush.bf16.msra.mxu0 %v346
    %399 = vmatpush.bf16.msra.mxu0 %v343
    %400 = vmatpush.bf16.msra.mxu0 %v340
    %401 = vmatpush.bf16.msra.mxu0 %v337
    %402 = vmatpush.bf16.msra.mxu0 %v334
    %403 = vmatmul.bf16.gmra.mxu0 %v212
    %v404 = vpop.f32.mrf.mxu0
    %v405 = vadd.f32 %v248, %v404
    %v406 = vpop.f32.mrf.mxu0
    %v407 = vadd.f32 %v248, %v406
    %408 = vdwg.mxu0
    %409 = vmatpush.bf16.msra.mxu0 %v356
    %410 = vmatpush.bf16.msra.mxu0 %v353
    %411 = vmatpush.bf16.msra.mxu0 %v350
    %412 = vmatpush.bf16.msra.mxu0 %v347
    %413 = vmatpush.bf16.msra.mxu0 %v344
    %414 = vmatpush.bf16.msra.mxu0 %v341
    %415 = vmatpush.bf16.msra.mxu0 %v338
    %416 = vmatpush.bf16.msra.mxu0 %v335
    %417 = vmatmul.bf16.gmra.mxu0 %v212
    %v418 = vpop.f32.mrf.mxu0
    %v419 = vadd.f32 %v249, %v418
    %v420 = vpop.f32.mrf.mxu0
    %v421 = vadd.f32 %v249, %v420
    %422 = vdwg.mxu0
    %v423 = vpack.c.bf16 %v393, %v391
    %v424 = vpack.c.bf16 %v407, %v405
    %v425 = vpack.c.bf16 %v421, %v419
    %vm426 = vcmask 523264
    %v428 = vsel %vm426, %v423, 0
    %v431 = vsel %vm426, %v424, 0
    %433 = vmatpush.bf16.xpose.msra.mxu0 0
    %434 = vmatpush.bf16.xpose.msra.mxu0 0
    %435 = vmatpush.bf16.xpose.msra.mxu0 0
    %436 = vmatpush.bf16.xpose.msra.mxu0 0
    %437 = vmatpush.bf16.xpose.msra.mxu0 0
    %438 = vmatpush.bf16.xpose.msra.mxu0 0
    %439 = vmatpush.bf16.xpose.msra.mxu0 0
    %440 = vmatpush.bf16.xpose.msra.mxu0 %v431
    %441 = vmatmul.bf16.gmra.mxu0 %v428
    %v442 = vpop.f32.mrf.mxu0
    %v443 = vadd.f32 %v210, %v442
    %v444 = vpop.f32.mrf.mxu0
    %v445 = vadd.f32 %v211, %v444
    %446 = vdwg.mxu0
    %vm447 = vcmask 130048
    %v448 = vsel %vm447, %v443, -inf
    %449 = vmax.xlane.f32.xlu0 %v448
    %v450 = vpop.xlane.xlu0 %449
    %v451 = vsel %vm447, %v445, -inf
    %452 = vmax.xlane.f32.xlu0 %v451
    %v453 = vpop.xlane.xlu0 %452
    %v454 = vsub.f32 %v443, %v450
    %v455 = vsub.f32 %v445, %v453
    %v456 = vmul.f32 %v454, 1.442695
    %v457 = vpow.pop %v456
    %v458 = vmul.f32 %v455, 1.442695
    %v459 = vpow.pop %v458
    %v460 = vsel %vm447, %v457, 0.0
    %461 = vadd.xlane.f32.xlu0 %v460
    %v462 = vpop.xlane.xlu0 %461
    %v463 = vsel %vm447, %v459, 0.0
    %464 = vadd.xlane.f32.xlu0 %v463
    %v465 = vpop.xlane.xlu0 %464
    %v466 = vrcp.pop %v462
    %v467 = vrcp.pop %v465
    %v468 = vmul.f32 %v457, %v466
    %v469 = vmul.f32 %v459, %v467
    %v470 = vpack.c.bf16 %v469, %v468
    %v472 = vsel %vm447, %v470, 0
    %474 = vmatpush.bf16.msra.mxu0 0
    %475 = vmatpush.bf16.msra.mxu0 0
    %476 = vmatpush.bf16.msra.mxu0 0
    %477 = vmatpush.bf16.msra.mxu0 0
    %478 = vmatpush.bf16.msra.mxu0 0
    %479 = vmatpush.bf16.msra.mxu0 0
    %480 = vmatpush.bf16.msra.mxu0 0
    %481 = vmatpush.bf16.msra.mxu0 %v425
    %482 = vmatmul.bf16.gmra.mxu0 %v472
    %v483 = vpop.f32.mrf.mxu0
    %v484 = vadd.f32 0.0, %v483
    %v485 = vpop.f32.mrf.mxu0
    %v486 = vadd.f32 0.0, %v485
    %487 = vdwg.mxu0
    %489 = vrot.lane.b32.xlu0 %v423, 64
    %v490 = vpop.permute.xlu0 %489
    %492 = vrot.lane.b32.xlu0 %v424, 64
    %v493 = vpop.permute.xlu0 %492
    %v495 = vsel %vm426, %v490, 0
    %v498 = vsel %vm426, %v493, 0
    %500 = vmatpush.bf16.xpose.msra.mxu0 0
    %501 = vmatpush.bf16.xpose.msra.mxu0 0
    %502 = vmatpush.bf16.xpose.msra.mxu0 0
    %503 = vmatpush.bf16.xpose.msra.mxu0 0
    %504 = vmatpush.bf16.xpose.msra.mxu0 0
    %505 = vmatpush.bf16.xpose.msra.mxu0 0
    %506 = vmatpush.bf16.xpose.msra.mxu0 0
    %507 = vmatpush.bf16.xpose.msra.mxu0 %v498
    %508 = vmatmul.bf16.gmra.mxu0 %v495
    %v509 = vpop.f32.mrf.mxu0
    %v510 = vadd.f32 %v210, %v509
    %v511 = vpop.f32.mrf.mxu0
    %v512 = vadd.f32 %v211, %v511
    %513 = vdwg.mxu0
    %v514 = vsel %vm447, %v510, -inf
    %515 = vmax.xlane.f32.xlu0 %v514
    %v516 = vpop.xlane.xlu0 %515
    %v517 = vsel %vm447, %v512, -inf
    %518 = vmax.xlane.f32.xlu0 %v517
    %v519 = vpop.xlane.xlu0 %518
    %v520 = vsub.f32 %v510, %v516
    %v521 = vsub.f32 %v512, %v519
    %v522 = vmul.f32 %v520, 1.442695
    %v523 = vpow.pop %v522
    %v524 = vmul.f32 %v521, 1.442695
    %v525 = vpow.pop %v524
    %v526 = vsel %vm447, %v523, 0.0
    %527 = vadd.xlane.f32.xlu0 %v526
    %v528 = vpop.xlane.xlu0 %527
    %v529 = vsel %vm447, %v525, 0.0
    %530 = vadd.xlane.f32.xlu0 %v529
    %v531 = vpop.xlane.xlu0 %530
    %v532 = vrcp.pop %v528
    %v533 = vrcp.pop %v531
    %v534 = vmul.f32 %v523, %v532
    %v535 = vmul.f32 %v525, %v533
    %v536 = vpack.c.bf16 %v535, %v534
    %538 = vrot.lane.b32.xlu0 %v425, 64
    %v539 = vpop.permute.xlu0 %538
    %v542 = vsel %vm447, %v536, 0
    %544 = vmatpush.bf16.msra.mxu0 0
    %545 = vmatpush.bf16.msra.mxu0 0
    %546 = vmatpush.bf16.msra.mxu0 0
    %547 = vmatpush.bf16.msra.mxu0 0
    %548 = vmatpush.bf16.msra.mxu0 0
    %549 = vmatpush.bf16.msra.mxu0 0
    %550 = vmatpush.bf16.msra.mxu0 0
    %551 = vmatpush.bf16.msra.mxu0 %v539
    %552 = vmatmul.bf16.gmra.mxu0 %v542
    %v553 = vpop.f32.mrf.mxu0
    %v554 = vadd.f32 0.0, %v553
    %v555 = vpop.f32.mrf.mxu0
    %v556 = vadd.f32 0.0, %v555
    %557 = vdwg.mxu0
    %560 = vrot.lane.b32.xlu0 %v554, 64
    %v561 = vpop.permute.xlu0 %560
    %562 = vrot.lane.b32.xlu0 %v556, 64
    %v563 = vpop.permute.xlu0 %562
    %v566 = vsel %vm426, %v484, %v561
    %v567 = vsel %vm426, %v486, %v563
    %v568 = vpack.c.bf16 %v567, %v566
    %v569 = vld [vmem:[#allocation10] sm:$0xf]
    %v570 = vld [vmem:[#allocation10 + $0x4] sm:$0xf]
    %v571 = vld [vmem:[#allocation10 + $0x8] sm:$0xf]
    %v572 = vld [vmem:[#allocation10 + $0xc] sm:$0xf]
    %v573 = vld [vmem:[#allocation10 + $0x10] sm:$0xf]
    %v574 = vld [vmem:[#allocation10 + $0x14] sm:$0xf]
    %v575 = vld [vmem:[#allocation10 + $0x18] sm:$0xf]
    %v576 = vld [vmem:[#allocation10 + $0x1c] sm:$0xf]
    %v577 = vld [vmem:[#allocation10 + $0x20] sm:$0xf]
    %v578 = vld [vmem:[#allocation10 + $0x24] sm:$0xf]
    %v579 = vld [vmem:[#allocation10 + $0x28] sm:$0xf]
    %v580 = vld [vmem:[#allocation10 + $0x2c] sm:$0xf]
    %v581 = vld [vmem:[#allocation10 + $0x30] sm:$0xf]
    %v582 = vld [vmem:[#allocation10 + $0x34] sm:$0xf]
    %v583 = vld [vmem:[#allocation10 + $0x38] sm:$0xf]
    %v584 = vld [vmem:[#allocation10 + $0x3c] sm:$0xf]
    %v585 = vld [vmem:[%s5] sm:$0x1]
    %v587 = vperm.slane %v585, 0
    %v605 = vunpack.c.l.b16 %v569
    %v606 = vunpack.c.l.b16 %v570
    %v607 = vunpack.c.l.b16 %v571
    %v608 = vunpack.c.l.b16 %v572
    %v609 = vunpack.c.l.b16 %v573
    %v610 = vunpack.c.l.b16 %v574
    %v611 = vunpack.c.l.b16 %v575
    %v612 = vunpack.c.l.b16 %v576
    %v613 = vunpack.c.l.b16 %v577
    %v614 = vunpack.c.l.b16 %v578
    %v615 = vunpack.c.l.b16 %v579
    %v616 = vunpack.c.l.b16 %v580
    %v617 = vunpack.c.l.b16 %v581
    %v618 = vunpack.c.l.b16 %v582
    %v619 = vunpack.c.l.b16 %v583
    %v620 = vunpack.c.l.b16 %v584
    %v621 = vpack.c.b16 %v606, %v605
    %v622 = vpack.c.b16 %v608, %v607
    %v623 = vpack.c.b16 %v610, %v609
    %v624 = vpack.c.b16 %v612, %v611
    %v625 = vpack.c.b16 %v614, %v613
    %v626 = vpack.c.b16 %v616, %v615
    %v627 = vpack.c.b16 %v618, %v617
    %v628 = vpack.c.b16 %v620, %v619
    %637 = vmatpush.bf16.msra.mxu0 %v628
    %638 = vmatpush.bf16.msra.mxu0 %v627
    %639 = vmatpush.bf16.msra.mxu0 %v626
    %640 = vmatpush.bf16.msra.mxu0 %v625
    %641 = vmatpush.bf16.msra.mxu0 %v624
    %642 = vmatpush.bf16.msra.mxu0 %v623
    %643 = vmatpush.bf16.msra.mxu0 %v622
    %644 = vmatpush.bf16.msra.mxu0 %v621
    %645 = vmatmul.bf16.gmra.mxu0 %v568
    %v646 = vpop.f32.mrf.mxu0
    %v647 = vadd.f32 %v587, %v646
    %v648 = vpop.f32.mrf.mxu0
    %v649 = vadd.f32 %v587, %v648
    %650 = vdwg.mxu0
    %v651 = vadd.f32 %v208, %v647
    %v652 = vadd.f32 %v209, %v649
    %v653 = vld [vmem:[#allocation11] sm:$0x1]
    %v654 = vld [vmem:[#allocation13] sm:$0x1]
    %655 = vadd.xlane.f32.xlu0 %v651
    %v656 = vpop.xlane.xlu0 %655
    %657 = vadd.xlane.f32.xlu0 %v652
    %v658 = vpop.xlane.xlu0 %657
    %v659 = vrcp.pop 128.0
    %v660 = vmul.f32 128.0, %v659
    %v661 = vsub.f32 1.0, %v660
    %v662 = vmul.f32 %v659, %v661
    %v663 = vadd.f32 %v659, %v662
    %vm664 = vweird.f32 %v659
    %v665 = vsel %vm664, %v659, %v663
    %v666 = vmul.f32 %v656, %v665
    %v667 = vmul.f32 %v658, %v665
    %v668 = vsub.f32 %v651, %v666
    %v669 = vsub.f32 %v652, %v667
    %v670 = vmul.f32 %v668, %v668
    %v671 = vmul.f32 %v669, %v669
    %672 = vadd.xlane.f32.xlu0 %v670
    %v673 = vpop.xlane.xlu0 %672
    %674 = vadd.xlane.f32.xlu0 %v671
    %v675 = vpop.xlane.xlu0 %674
    %v676 = vmul.f32 %v673, %v665
    %v677 = vmul.f32 %v675, %v665
    %v678 = vadd.f32 %v676, 1e-05
    %v679 = vadd.f32 %v677, 1e-05
    %v680 = vrsqrt.pop %v678
    %v681 = vmul.f32 %v680, %v678
    %v682 = vmul.f32 %v681, %v680
    %v683 = vmul.f32 0.5, %v682
    %v684 = vsub.f32 1.5, %v683
    %v685 = vmul.f32 %v680, %v684
    %vm686 = vweird.f32 %v678
    %vm687 = vweird.f32 %v680
    %vm688 = vmor %vm686, %vm687
    %v689 = vsel %vm688, %v680, %v685
    %v690 = vrsqrt.pop %v679
    %v691 = vmul.f32 %v690, %v679
    %v692 = vmul.f32 %v691, %v690
    %v693 = vmul.f32 0.5, %v692
    %v694 = vsub.f32 1.5, %v693
    %v695 = vmul.f32 %v690, %v694
    %vm696 = vweird.f32 %v679
    %vm697 = vweird.f32 %v690
    %vm698 = vmor %vm696, %vm697
    %v699 = vsel %vm698, %v690, %v695
    %v700 = vmul.f32 %v668, %v689
    %v701 = vmul.f32 %v669, %v699
    %v703 = vperm.slane %v653, 0
    %v705 = vmul.f32 %v700, %v703
    %v706 = vmul.f32 %v701, %v703
    %v708 = vperm.slane %v654, 0
    %v710 = vadd.f32 %v705, %v708
    %v711 = vadd.f32 %v706, %v708
    %v712 = vld [vmem:[#allocation14] sm:$0x1]
    %v714 = vperm.slane %v712, 0
    %v716 = vmul.f32 %v710, %v714
    %v717 = vmul.f32 %v711, %v714
    %718 = vadd.xlane.f32.xlu0 %v716
    %v719 = vpop.xlane.xlu0 %718
    %720 = vadd.xlane.f32.xlu0 %v717
    %v721 = vpop.xlane.xlu0 %720
    %v722 = vxor.u32 %v719, 2147483648
    %v723 = vxor.u32 %v721, 2147483648
    %v724 = vmul.f32 %v722, 1.442695
    %v725 = vpow.pop %v724
    %v726 = vmul.f32 %v723, 1.442695
    %v727 = vpow.pop %v726
    %v728 = vadd.f32 %v725, 1.0
    %v729 = vadd.f32 %v727, 1.0
    %v730 = vrcp.pop %v728
    %v731 = vmul.f32 %v728, %v730
    %v732 = vsub.f32 1.0, %v731
    %v733 = vmul.f32 %v730, %v732
    %v734 = vadd.f32 %v730, %v733
    %vm735 = vweird.f32 %v728
    %vm736 = vweird.f32 %v730
    %vm737 = vmor %vm735, %vm736
    %v738 = vsel %vm737, %v730, %v734
    %v739 = vand.u32 2147483647, %v728
    %vm740 = vcmp.eq.f32.partialorder %v739, 8.507059e+37
    %v741 = vand.u32 %v728, 2147483648
    %v742 = vor.u32 1.1754944e-38, %v741
    %v743 = vsel %vm740, %v742, %v738
    %v744 = vmul.f32 1.0, %v743
    %v745 = vrcp.pop %v729
    %v746 = vmul.f32 %v729, %v745
    %v747 = vsub.f32 1.0, %v746
    %v748 = vmul.f32 %v745, %v747
    %v749 = vadd.f32 %v745, %v748
    %vm750 = vweird.f32 %v729
    %vm751 = vweird.f32 %v745
    %vm752 = vmor %vm750, %vm751
    %v753 = vsel %vm752, %v745, %v749
    %v754 = vand.u32 2147483647, %v729
    %vm755 = vcmp.eq.f32.partialorder %v754, 8.507059e+37
    %v756 = vand.u32 %v729, 2147483648
    %v757 = vor.u32 1.1754944e-38, %v756
    %v758 = vsel %vm755, %v757, %v753
    %v759 = vmul.f32 1.0, %v758
    %v760 = vpack.c.bf16 %v711, %v710
    %v761 = vld [vmem:[#allocation16] sm:$0xff]
    %v762 = vld [vmem:[#allocation16 + $0x8] sm:$0xff]
    %v763 = vld [vmem:[#allocation16 + $0x10] sm:$0xff]
    %v764 = vld [vmem:[#allocation16 + $0x18] sm:$0xff]
    %v765 = vld [vmem:[#allocation16 + $0x20] sm:$0xff]
    %v766 = vld [vmem:[#allocation16 + $0x28] sm:$0xff]
    %v767 = vld [vmem:[#allocation16 + $0x30] sm:$0xff]
    %v768 = vld [vmem:[#allocation16 + $0x38] sm:$0xff]
    %v769 = vld [vmem:[#allocation16 + $0x40] sm:$0xff]
    %v770 = vld [vmem:[#allocation16 + $0x48] sm:$0xff]
    %v771 = vld [vmem:[#allocation16 + $0x50] sm:$0xff]
    %v772 = vld [vmem:[#allocation16 + $0x58] sm:$0xff]
    %v773 = vld [vmem:[#allocation16 + $0x60] sm:$0xff]
    %v774 = vld [vmem:[#allocation16 + $0x68] sm:$0xff]
    %v775 = vld [vmem:[#allocation16 + $0x70] sm:$0xff]
    %v776 = vld [vmem:[#allocation16 + $0x78] sm:$0xff]
    %v777 = vld [vmem:[%s10] sm:$0x3]
    %v779 = vperm.slane %v777, 0
    %v780 = vperm.slane %v777, 1
    %v799 = vunpack.c.l.b16 %v761
    %v800 = vunpack.c.h.b16 %v761
    %v801 = vunpack.c.l.b16 %v762
    %v802 = vunpack.c.h.b16 %v762
    %v803 = vunpack.c.l.b16 %v763
    %v804 = vunpack.c.h.b16 %v763
    %v805 = vunpack.c.l.b16 %v764
    %v806 = vunpack.c.h.b16 %v764
    %v807 = vunpack.c.l.b16 %v765
    %v808 = vunpack.c.h.b16 %v765
    %v809 = vunpack.c.l.b16 %v766
    %v810 = vunpack.c.h.b16 %v766
    %v811 = vunpack.c.l.b16 %v767
    %v812 = vunpack.c.h.b16 %v767
    %v813 = vunpack.c.l.b16 %v768
    %v814 = vunpack.c.h.b16 %v768
    %v815 = vunpack.c.l.b16 %v769
    %v816 = vunpack.c.h.b16 %v769
    %v817 = vunpack.c.l.b16 %v770
    %v818 = vunpack.c.h.b16 %v770
    %v819 = vunpack.c.l.b16 %v771
    %v820 = vunpack.c.h.b16 %v771
    %v821 = vunpack.c.l.b16 %v772
    %v822 = vunpack.c.h.b16 %v772
    %v823 = vunpack.c.l.b16 %v773
    %v824 = vunpack.c.h.b16 %v773
    %v825 = vunpack.c.l.b16 %v774
    %v826 = vunpack.c.h.b16 %v774
    %v827 = vunpack.c.l.b16 %v775
    %v828 = vunpack.c.h.b16 %v775
    %v829 = vunpack.c.l.b16 %v776
    %v830 = vunpack.c.h.b16 %v776
    %v831 = vpack.c.b16 %v801, %v799
    %v832 = vpack.c.b16 %v802, %v800
    %v833 = vpack.c.b16 %v805, %v803
    %v834 = vpack.c.b16 %v806, %v804
    %v835 = vpack.c.b16 %v809, %v807
    %v836 = vpack.c.b16 %v810, %v808
    %v837 = vpack.c.b16 %v813, %v811
    %v838 = vpack.c.b16 %v814, %v812
    %v839 = vpack.c.b16 %v817, %v815
    %v840 = vpack.c.b16 %v818, %v816
    %v841 = vpack.c.b16 %v821, %v819
    %v842 = vpack.c.b16 %v822, %v820
    %v843 = vpack.c.b16 %v825, %v823
    %v844 = vpack.c.b16 %v826, %v824
    %v845 = vpack.c.b16 %v829, %v827
    %v846 = vpack.c.b16 %v830, %v828
    %863 = vmatpush.bf16.msra.mxu0 %v845
    %864 = vmatpush.bf16.msra.mxu0 %v843
    %865 = vmatpush.bf16.msra.mxu0 %v841
    %866 = vmatpush.bf16.msra.mxu0 %v839
    %867 = vmatpush.bf16.msra.mxu0 %v837
    %868 = vmatpush.bf16.msra.mxu0 %v835
    %869 = vmatpush.bf16.msra.mxu0 %v833
    %870 = vmatpush.bf16.msra.mxu0 %v831
    %871 = vmatmul.bf16.gmra.mxu0 %v760
    %v872 = vpop.f32.mrf.mxu0
    %v873 = vadd.f32 %v779, %v872
    %v874 = vpop.f32.mrf.mxu0
    %v875 = vadd.f32 %v779, %v874
    %876 = vdwg.mxu0
    %877 = vmatpush.bf16.msra.mxu0 %v846
    %878 = vmatpush.bf16.msra.mxu0 %v844
    %879 = vmatpush.bf16.msra.mxu0 %v842
    %880 = vmatpush.bf16.msra.mxu0 %v840
    %881 = vmatpush.bf16.msra.mxu0 %v838
    %882 = vmatpush.bf16.msra.mxu0 %v836
    %883 = vmatpush.bf16.msra.mxu0 %v834
    %884 = vmatpush.bf16.msra.mxu0 %v832
    %885 = vmatmul.bf16.gmra.mxu0 %v760
    %v886 = vpop.f32.mrf.mxu0
    %v887 = vadd.f32 %v780, %v886
    %v888 = vpop.f32.mrf.mxu0
    %v889 = vadd.f32 %v780, %v888
    %890 = vdwg.mxu0
    %v891 = vmul.f32 %v873, %v744
    %v892 = vmul.f32 %v887, %v744
    %v893 = vmul.f32 %v875, %v759
    %v894 = vmul.f32 %v889, %v759
    %v895 = vmax.f32 %v891, 0.0
    %v896 = vmax.f32 %v892, 0.0
    %v897 = vmax.f32 %v893, 0.0
    %v898 = vmax.f32 %v894, 0.0
    %v899 = vpack.c.bf16 %v897, %v895
    %v900 = vpack.c.bf16 %v898, %v896
    %v901 = vld [vmem:[#allocation17] sm:$0xf]
    %v902 = vld [vmem:[#allocation17 + $0x4] sm:$0xf]
    %v903 = vld [vmem:[#allocation17 + $0x8] sm:$0xf]
    %v904 = vld [vmem:[#allocation17 + $0xc] sm:$0xf]
    %v905 = vld [vmem:[#allocation17 + $0x10] sm:$0xf]
    %v906 = vld [vmem:[#allocation17 + $0x14] sm:$0xf]
    %v907 = vld [vmem:[#allocation17 + $0x18] sm:$0xf]
    %v908 = vld [vmem:[#allocation17 + $0x1c] sm:$0xf]
    %v909 = vld [vmem:[#allocation17 + $0x20] sm:$0xf]
    %v910 = vld [vmem:[#allocation17 + $0x24] sm:$0xf]
    %v911 = vld [vmem:[#allocation17 + $0x28] sm:$0xf]
    %v912 = vld [vmem:[#allocation17 + $0x2c] sm:$0xf]
    %v913 = vld [vmem:[#allocation17 + $0x30] sm:$0xf]
    %v914 = vld [vmem:[#allocation17 + $0x34] sm:$0xf]
    %v915 = vld [vmem:[#allocation17 + $0x38] sm:$0xf]
    %v916 = vld [vmem:[#allocation17 + $0x3c] sm:$0xf]
    %v917 = vld [vmem:[#allocation17 + $0x40] sm:$0xf]
    %v918 = vld [vmem:[#allocation17 + $0x44] sm:$0xf]
    %v919 = vld [vmem:[#allocation17 + $0x48] sm:$0xf]
    %v920 = vld [vmem:[#allocation17 + $0x4c] sm:$0xf]
    %v921 = vld [vmem:[#allocation17 + $0x50] sm:$0xf]
    %v922 = vld [vmem:[#allocation17 + $0x54] sm:$0xf]
    %v923 = vld [vmem:[#allocation17 + $0x58] sm:$0xf]
    %v924 = vld [vmem:[#allocation17 + $0x5c] sm:$0xf]
    %v925 = vld [vmem:[#allocation17 + $0x60] sm:$0xf]
    %v926 = vld [vmem:[#allocation17 + $0x64] sm:$0xf]
    %v927 = vld [vmem:[#allocation17 + $0x68] sm:$0xf]
    %v928 = vld [vmem:[#allocation17 + $0x6c] sm:$0xf]
    %v929 = vld [vmem:[#allocation17 + $0x70] sm:$0xf]
    %v930 = vld [vmem:[#allocation17 + $0x74] sm:$0xf]
    %v931 = vld [vmem:[#allocation17 + $0x78] sm:$0xf]
    %v932 = vld [vmem:[#allocation17 + $0x7c] sm:$0xf]
    %v933 = vld [vmem:[%s12] sm:$0x1]
    %v935 = vperm.slane %v933, 0
    %v969 = vunpack.c.l.b16 %v901
    %v970 = vunpack.c.l.b16 %v902
    %v971 = vunpack.c.l.b16 %v903
    %v972 = vunpack.c.l.b16 %v904
    %v973 = vunpack.c.l.b16 %v905
    %v974 = vunpack.c.l.b16 %v906
    %v975 = vunpack.c.l.b16 %v907
    %v976 = vunpack.c.l.b16 %v908
    %v977 = vunpack.c.l.b16 %v909
    %v978 = vunpack.c.l.b16 %v910
    %v979 = vunpack.c.l.b16 %v911
    %v980 = vunpack.c.l.b16 %v912
    %v981 = vunpack.c.l.b16 %v913
    %v982 = vunpack.c.l.b16 %v914
    %v983 = vunpack.c.l.b16 %v915
    %v984 = vunpack.c.l.b16 %v916
    %v985 = vunpack.c.l.b16 %v917
    %v986 = vunpack.c.l.b16 %v918
    %v987 = vunpack.c.l.b16 %v919
    %v988 = vunpack.c.l.b16 %v920
    %v989 = vunpack.c.l.b16 %v921
    %v990 = vunpack.c.l.b16 %v922
    %v991 = vunpack.c.l.b16 %v923
    %v992 = vunpack.c.l.b16 %v924
    %v993 = vunpack.c.l.b16 %v925
    %v994 = vunpack.c.l.b16 %v926
    %v995 = vunpack.c.l.b16 %v927
    %v996 = vunpack.c.l.b16 %v928
    %v997 = vunpack.c.l.b16 %v929
    %v998 = vunpack.c.l.b16 %v930
    %v999 = vunpack.c.l.b16 %v931
    %v1000 = vunpack.c.l.b16 %v932
    %v1001 = vpack.c.b16 %v970, %v969
    %v1002 = vpack.c.b16 %v972, %v971
    %v1003 = vpack.c.b16 %v974, %v973
    %v1004 = vpack.c.b16 %v976, %v975
    %v1005 = vpack.c.b16 %v978, %v977
    %v1006 = vpack.c.b16 %v980, %v979
    %v1007 = vpack.c.b16 %v982, %v981
    %v1008 = vpack.c.b16 %v984, %v983
    %v1009 = vpack.c.b16 %v986, %v985
    %v1010 = vpack.c.b16 %v988, %v987
    %v1011 = vpack.c.b16 %v990, %v989
    %v1012 = vpack.c.b16 %v992, %v991
    %v1013 = vpack.c.b16 %v994, %v993
    %v1014 = vpack.c.b16 %v996, %v995
    %v1015 = vpack.c.b16 %v998, %v997
    %v1016 = vpack.c.b16 %v1000, %v999
    %1033 = vmatpush.bf16.msra.mxu0 %v1008
    %1034 = vmatpush.bf16.msra.mxu0 %v1007
    %1035 = vmatpush.bf16.msra.mxu0 %v1006
    %1036 = vmatpush.bf16.msra.mxu0 %v1005
    %1037 = vmatpush.bf16.msra.mxu0 %v1004
    %1038 = vmatpush.bf16.msra.mxu0 %v1003
    %1039 = vmatpush.bf16.msra.mxu0 %v1002
    %1040 = vmatpush.bf16.msra.mxu0 %v1001
    %1041 = vmatmul.bf16.gmra.mxu0 %v899
    %v1042 = vpop.f32.mrf.mxu0
    %v1043 = vadd.f32 %v935, %v1042
    %v1044 = vpop.f32.mrf.mxu0
    %v1045 = vadd.f32 %v935, %v1044
    %1046 = vdwg.mxu0
    %1047 = vmatpush.bf16.msra.mxu0 %v1016
    %1048 = vmatpush.bf16.msra.mxu0 %v1015
    %1049 = vmatpush.bf16.msra.mxu0 %v1014
    %1050 = vmatpush.bf16.msra.mxu0 %v1013
    %1051 = vmatpush.bf16.msra.mxu0 %v1012
    %1052 = vmatpush.bf16.msra.mxu0 %v1011
    %1053 = vmatpush.bf16.msra.mxu0 %v1010
    %1054 = vmatpush.bf16.msra.mxu0 %v1009
    %1055 = vmatmul.bf16.gmra.mxu0 %v900
    %v1056 = vpop.f32.mrf.mxu0
    %v1057 = vadd.f32 %v1043, %v1056
    %v1058 = vpop.f32.mrf.mxu0
    %v1059 = vadd.f32 %v1045, %v1058
    %1060 = vdwg.mxu0
    %v1061 = vadd.f32 %v710, %v1057
    %v1062 = vadd.f32 %v711, %v1059
    %v1063 = vld [vmem:[%s13] sm:$0x1]
    %v1064 = vld [vmem:[%s14] sm:$0x1]
    %1065 = vadd.xlane.f32.xlu0 %v1061
    %v1066 = vpop.xlane.xlu0 %1065
    %1067 = vadd.xlane.f32.xlu0 %v1062
    %v1068 = vpop.xlane.xlu0 %1067
    %v1069 = vmul.f32 %v1066, %v665
    %v1070 = vmul.f32 %v1068, %v665
    %v1071 = vsub.f32 %v1061, %v1069
    %v1072 = vsub.f32 %v1062, %v1070
    %v1073 = vmul.f32 %v1071, %v1071
    %v1074 = vmul.f32 %v1072, %v1072
    %1075 = vadd.xlane.f32.xlu0 %v1073
    %v1076 = vpop.xlane.xlu0 %1075
    %1077 = vadd.xlane.f32.xlu0 %v1074
    %v1078 = vpop.xlane.xlu0 %1077
    %v1079 = vmul.f32 %v1076, %v665
    %v1080 = vmul.f32 %v1078, %v665
    %v1081 = vadd.f32 %v1079, 1e-05
    %v1082 = vadd.f32 %v1080, 1e-05
    %v1083 = vrsqrt.pop %v1081
    %v1084 = vmul.f32 %v1083, %v1081
    %v1085 = vmul.f32 %v1084, %v1083
    %v1086 = vmul.f32 0.5, %v1085
    %v1087 = vsub.f32 1.5, %v1086
    %v1088 = vmul.f32 %v1083, %v1087
    %vm1089 = vweird.f32 %v1081
    %vm1090 = vweird.f32 %v1083
    %vm1091 = vmor %vm1089, %vm1090
    %v1092 = vsel %vm1091, %v1083, %v1088
    %v1093 = vrsqrt.pop %v1082
    %v1094 = vmul.f32 %v1093, %v1082
    %v1095 = vmul.f32 %v1094, %v1093
    %v1096 = vmul.f32 0.5, %v1095
    %v1097 = vsub.f32 1.5, %v1096
    %v1098 = vmul.f32 %v1093, %v1097
    %vm1099 = vweird.f32 %v1082
    %vm1100 = vweird.f32 %v1093
    %vm1101 = vmor %vm1099, %vm1100
    %v1102 = vsel %vm1101, %v1093, %v1098
    %v1103 = vmul.f32 %v1071, %v1092
    %v1104 = vmul.f32 %v1072, %v1102
    %v1106 = vperm.slane %v1063, 0
    %v1108 = vmul.f32 %v1103, %v1106
    %v1109 = vmul.f32 %v1104, %v1106
    %v1111 = vperm.slane %v1064, 0
    %v1113 = vadd.f32 %v1108, %v1111
    %v1114 = vadd.f32 %v1109, %v1111
    %v1115 = vpack.c.bf16 %v1114, %v1113
    %s1116 = scalar_lea.vmem [#allocation7], 192
    %v1117 = vld [vmem:[%s1116] sm:$0xff]
    %v1118 = vld [vmem:[%s1116 + $0x8] sm:$0xf]
    %v1119 = vld [vmem:[%s1116 + $0xc] sm:$0xff]
    %v1120 = vld [vmem:[%s1116 + $0x14] sm:$0xf]
    %v1121 = vld [vmem:[%s1116 + $0x18] sm:$0xff]
    %v1122 = vld [vmem:[%s1116 + $0x20] sm:$0xf]
    %v1123 = vld [vmem:[%s1116 + $0x24] sm:$0xff]
    %v1124 = vld [vmem:[%s1116 + $0x2c] sm:$0xf]
    %v1125 = vld [vmem:[%s1116 + $0x30] sm:$0xff]
    %v1126 = vld [vmem:[%s1116 + $0x38] sm:$0xf]
    %v1127 = vld [vmem:[%s1116 + $0x3c] sm:$0xff]
    %v1128 = vld [vmem:[%s1116 + $0x44] sm:$0xf]
    %v1129 = vld [vmem:[%s1116 + $0x48] sm:$0xff]
    %v1130 = vld [vmem:[%s1116 + $0x50] sm:$0xf]
    %v1131 = vld [vmem:[%s1116 + $0x54] sm:$0xff]
    %v1132 = vld [vmem:[%s1116 + $0x5c] sm:$0xf]
    %v1133 = vld [vmem:[%s1116 + $0x60] sm:$0xff]
    %v1134 = vld [vmem:[%s1116 + $0x68] sm:$0xf]
    %v1135 = vld [vmem:[%s1116 + $0x6c] sm:$0xff]
    %v1136 = vld [vmem:[%s1116 + $0x74] sm:$0xf]
    %v1137 = vld [vmem:[%s1116 + $0x78] sm:$0xff]
    %v1138 = vld [vmem:[%s1116 + $0x80] sm:$0xf]
    %v1139 = vld [vmem:[%s1116 + $0x84] sm:$0xff]
    %v1140 = vld [vmem:[%s1116 + $0x8c] sm:$0xf]
    %v1141 = vld [vmem:[%s1116 + $0x90] sm:$0xff]
    %v1142 = vld [vmem:[%s1116 + $0x98] sm:$0xf]
    %v1143 = vld [vmem:[%s1116 + $0x9c] sm:$0xff]
    %v1144 = vld [vmem:[%s1116 + $0xa4] sm:$0xf]
    %v1145 = vld [vmem:[%s1116 + $0xa8] sm:$0xff]
    %v1146 = vld [vmem:[%s1116 + $0xb0] sm:$0xf]
    %v1147 = vld [vmem:[%s1116 + $0xb4] sm:$0xff]
    %v1148 = vld [vmem:[%s1116 + $0xbc] sm:$0xf]
    %s1149 = scalar_lea.vmem [#allocation8], 3
    %v1150 = vld [vmem:[%s1149] sm:$0x7]
    %v1152 = vperm.slane %v1150, 0
    %v1153 = vperm.slane %v1150, 1
    %v1154 = vperm.slane %v1150, 2
    %v1190 = vunpack.c.l.b16 %v1117
    %v1191 = vunpack.c.h.b16 %v1117
    %v1192 = vunpack.c.l.b16 %v1118
    %v1193 = vunpack.c.l.b16 %v1119
    %v1194 = vunpack.c.h.b16 %v1119
    %v1195 = vunpack.c.l.b16 %v1120
    %v1196 = vunpack.c.l.b16 %v1121
    %v1197 = vunpack.c.h.b16 %v1121
    %v1198 = vunpack.c.l.b16 %v1122
    %v1199 = vunpack.c.l.b16 %v1123
    %v1200 = vunpack.c.h.b16 %v1123
    %v1201 = vunpack.c.l.b16 %v1124
    %v1202 = vunpack.c.l.b16 %v1125
    %v1203 = vunpack.c.h.b16 %v1125
    %v1204 = vunpack.c.l.b16 %v1126
    %v1205 = vunpack.c.l.b16 %v1127
    %v1206 = vunpack.c.h.b16 %v1127
    %v1207 = vunpack.c.l.b16 %v1128
    %v1208 = vunpack.c.l.b16 %v1129
    %v1209 = vunpack.c.h.b16 %v1129
    %v1210 = vunpack.c.l.b16 %v1130
    %v1211 = vunpack.c.l.b16 %v1131
    %v1212 = vunpack.c.h.b16 %v1131
    %v1213 = vunpack.c.l.b16 %v1132
    %v1214 = vunpack.c.l.b16 %v1133
    %v1215 = vunpack.c.h.b16 %v1133
    %v1216 = vunpack.c.l.b16 %v1134
    %v1217 = vunpack.c.l.b16 %v1135
    %v1218 = vunpack.c.h.b16 %v1135
    %v1219 = vunpack.c.l.b16 %v1136
    %v1220 = vunpack.c.l.b16 %v1137
    %v1221 = vunpack.c.h.b16 %v1137
    %v1222 = vunpack.c.l.b16 %v1138
    %v1223 = vunpack.c.l.b16 %v1139
    %v1224 = vunpack.c.h.b16 %v1139
    %v1225 = vunpack.c.l.b16 %v1140
    %v1226 = vunpack.c.l.b16 %v1141
    %v1227 = vunpack.c.h.b16 %v1141
    %v1228 = vunpack.c.l.b16 %v1142
    %v1229 = vunpack.c.l.b16 %v1143
    %v1230 = vunpack.c.h.b16 %v1143
    %v1231 = vunpack.c.l.b16 %v1144
    %v1232 = vunpack.c.l.b16 %v1145
    %v1233 = vunpack.c.h.b16 %v1145
    %v1234 = vunpack.c.l.b16 %v1146
    %v1235 = vunpack.c.l.b16 %v1147
    %v1236 = vunpack.c.h.b16 %v1147
    %v1237 = vunpack.c.l.b16 %v1148
    %v1238 = vpack.c.b16 %v1193, %v1190
    %v1239 = vpack.c.b16 %v1194, %v1191
    %v1240 = vpack.c.b16 %v1195, %v1192
    %v1241 = vpack.c.b16 %v1199, %v1196
    %v1242 = vpack.c.b16 %v1200, %v1197
    %v1243 = vpack.c.b16 %v1201, %v1198
    %v1244 = vpack.c.b16 %v1205, %v1202
    %v1245 = vpack.c.b16 %v1206, %v1203
    %v1246 = vpack.c.b16 %v1207, %v1204
    %v1247 = vpack.c.b16 %v1211, %v1208
    %v1248 = vpack.c.b16 %v1212, %v1209
    %v1249 = vpack.c.b16 %v1213, %v1210
    %v1250 = vpack.c.b16 %v1217, %v1214
    %v1251 = vpack.c.b16 %v1218, %v1215
    %v1252 = vpack.c.b16 %v1219, %v1216
    %v1253 = vpack.c.b16 %v1223, %v1220
    %v1254 = vpack.c.b16 %v1224, %v1221
    %v1255 = vpack.c.b16 %v1225, %v1222
    %v1256 = vpack.c.b16 %v1229, %v1226
    %v1257 = vpack.c.b16 %v1230, %v1227
    %v1258 = vpack.c.b16 %v1231, %v1228
    %v1259 = vpack.c.b16 %v1235, %v1232
    %v1260 = vpack.c.b16 %v1236, %v1233
    %v1261 = vpack.c.b16 %v1237, %v1234
    %1286 = vmatpush.bf16.msra.mxu0 %v1259
    %1287 = vmatpush.bf16.msra.mxu0 %v1256
    %1288 = vmatpush.bf16.msra.mxu0 %v1253
    %1289 = vmatpush.bf16.msra.mxu0 %v1250
    %1290 = vmatpush.bf16.msra.mxu0 %v1247
    %1291 = vmatpush.bf16.msra.mxu0 %v1244
    %1292 = vmatpush.bf16.msra.mxu0 %v1241
    %1293 = vmatpush.bf16.msra.mxu0 %v1238
    %1294 = vmatmul.bf16.gmra.mxu0 %v1115
    %v1295 = vpop.f32.mrf.mxu0
    %v1296 = vadd.f32 %v1152, %v1295
    %v1297 = vpop.f32.mrf.mxu0
    %v1298 = vadd.f32 %v1152, %v1297
    %1299 = vdwg.mxu0
    %1300 = vmatpush.bf16.msra.mxu0 %v1260
    %1301 = vmatpush.bf16.msra.mxu0 %v1257
    %1302 = vmatpush.bf16.msra.mxu0 %v1254
    %1303 = vmatpush.bf16.msra.mxu0 %v1251
    %1304 = vmatpush.bf16.msra.mxu0 %v1248
    %1305 = vmatpush.bf16.msra.mxu0 %v1245
    %1306 = vmatpush.bf16.msra.mxu0 %v1242
    %1307 = vmatpush.bf16.msra.mxu0 %v1239
    %1308 = vmatmul.bf16.gmra.mxu0 %v1115
    %v1309 = vpop.f32.mrf.mxu0
    %v1310 = vadd.f32 %v1153, %v1309
    %v1311 = vpop.f32.mrf.mxu0
    %v1312 = vadd.f32 %v1153, %v1311
    %1313 = vdwg.mxu0
    %1314 = vmatpush.bf16.msra.mxu0 %v1261
    %1315 = vmatpush.bf16.msra.mxu0 %v1258
    %1316 = vmatpush.bf16.msra.mxu0 %v1255
    %1317 = vmatpush.bf16.msra.mxu0 %v1252
    %1318 = vmatpush.bf16.msra.mxu0 %v1249
    %1319 = vmatpush.bf16.msra.mxu0 %v1246
    %1320 = vmatpush.bf16.msra.mxu0 %v1243
    %1321 = vmatpush.bf16.msra.mxu0 %v1240
    %1322 = vmatmul.bf16.gmra.mxu0 %v1115
    %v1323 = vpop.f32.mrf.mxu0
    %v1324 = vadd.f32 %v1154, %v1323
    %v1325 = vpop.f32.mrf.mxu0
    %v1326 = vadd.f32 %v1154, %v1325
    %1327 = vdwg.mxu0
    %v1328 = vpack.c.bf16 %v1298, %v1296
    %v1329 = vpack.c.bf16 %v1312, %v1310
    %v1330 = vpack.c.bf16 %v1326, %v1324
    %v1332 = vsel %vm426, %v1328, 0
    %v1335 = vsel %vm426, %v1329, 0
    %1337 = vmatpush.bf16.xpose.msra.mxu0 0
    %1338 = vmatpush.bf16.xpose.msra.mxu0 0
    %1339 = vmatpush.bf16.xpose.msra.mxu0 0
    %1340 = vmatpush.bf16.xpose.msra.mxu0 0
    %1341 = vmatpush.bf16.xpose.msra.mxu0 0
    %1342 = vmatpush.bf16.xpose.msra.mxu0 0
    %1343 = vmatpush.bf16.xpose.msra.mxu0 0
    %1344 = vmatpush.bf16.xpose.msra.mxu0 %v1335
    %1345 = vmatmul.bf16.gmra.mxu0 %v1332
    %v1346 = vpop.f32.mrf.mxu0
    %v1347 = vadd.f32 %v210, %v1346
    %v1348 = vpop.f32.mrf.mxu0
    %v1349 = vadd.f32 %v211, %v1348
    %1350 = vdwg.mxu0
    %v1351 = vsel %vm447, %v1347, -inf
    %1352 = vmax.xlane.f32.xlu0 %v1351
    %v1353 = vpop.xlane.xlu0 %1352
    %v1354 = vsel %vm447, %v1349, -inf
    %1355 = vmax.xlane.f32.xlu0 %v1354
    %v1356 = vpop.xlane.xlu0 %1355
    %v1357 = vsub.f32 %v1347, %v1353
    %v1358 = vsub.f32 %v1349, %v1356
    %v1359 = vmul.f32 %v1357, 1.442695
    %v1360 = vpow.pop %v1359
    %v1361 = vmul.f32 %v1358, 1.442695
    %v1362 = vpow.pop %v1361
    %v1363 = vsel %vm447, %v1360, 0.0
    %1364 = vadd.xlane.f32.xlu0 %v1363
    %v1365 = vpop.xlane.xlu0 %1364
    %v1366 = vsel %vm447, %v1362, 0.0
    %1367 = vadd.xlane.f32.xlu0 %v1366
    %v1368 = vpop.xlane.xlu0 %1367
    %v1369 = vrcp.pop %v1365
    %v1370 = vrcp.pop %v1368
    %v1371 = vmul.f32 %v1360, %v1369
    %v1372 = vmul.f32 %v1362, %v1370
    %v1373 = vpack.c.bf16 %v1372, %v1371
    %v1375 = vsel %vm447, %v1373, 0
    %1377 = vmatpush.bf16.msra.mxu0 0
    %1378 = vmatpush.bf16.msra.mxu0 0
    %1379 = vmatpush.bf16.msra.mxu0 0
    %1380 = vmatpush.bf16.msra.mxu0 0
    %1381 = vmatpush.bf16.msra.mxu0 0
    %1382 = vmatpush.bf16.msra.mxu0 0
    %1383 = vmatpush.bf16.msra.mxu0 0
    %1384 = vmatpush.bf16.msra.mxu0 %v1330
    %1385 = vmatmul.bf16.gmra.mxu0 %v1375
    %v1386 = vpop.f32.mrf.mxu0
    %v1387 = vadd.f32 0.0, %v1386
    %v1388 = vpop.f32.mrf.mxu0
    %v1389 = vadd.f32 0.0, %v1388
    %1390 = vdwg.mxu0
    %1392 = vrot.lane.b32.xlu0 %v1328, 64
    %v1393 = vpop.permute.xlu0 %1392
    %1395 = vrot.lane.b32.xlu0 %v1329, 64
    %v1396 = vpop.permute.xlu0 %1395
    %v1398 = vsel %vm426, %v1393, 0
    %v1401 = vsel %vm426, %v1396, 0
    %1403 = vmatpush.bf16.xpose.msra.mxu0 0
    %1404 = vmatpush.bf16.xpose.msra.mxu0 0
    %1405 = vmatpush.bf16.xpose.msra.mxu0 0
    %1406 = vmatpush.bf16.xpose.msra.mxu0 0
    %1407 = vmatpush.bf16.xpose.msra.mxu0 0
    %1408 = vmatpush.bf16.xpose.msra.mxu0 0
    %1409 = vmatpush.bf16.xpose.msra.mxu0 0
    %1410 = vmatpush.bf16.xpose.msra.mxu0 %v1401
    %1411 = vmatmul.bf16.gmra.mxu0 %v1398
    %v1412 = vpop.f32.mrf.mxu0
    %v1413 = vadd.f32 %v210, %v1412
    %v1414 = vpop.f32.mrf.mxu0
    %v1415 = vadd.f32 %v211, %v1414
    %1416 = vdwg.mxu0
    %v1417 = vsel %vm447, %v1413, -inf
    %1418 = vmax.xlane.f32.xlu0 %v1417
    %v1419 = vpop.xlane.xlu0 %1418
    %v1420 = vsel %vm447, %v1415, -inf
    %1421 = vmax.xlane.f32.xlu0 %v1420
    %v1422 = vpop.xlane.xlu0 %1421
    %v1423 = vsub.f32 %v1413, %v1419
    %v1424 = vsub.f32 %v1415, %v1422
    %v1425 = vmul.f32 %v1423, 1.442695
    %v1426 = vpow.pop %v1425
    %v1427 = vmul.f32 %v1424, 1.442695
    %v1428 = vpow.pop %v1427
    %v1429 = vsel %vm447, %v1426, 0.0
    %1430 = vadd.xlane.f32.xlu0 %v1429
    %v1431 = vpop.xlane.xlu0 %1430
    %v1432 = vsel %vm447, %v1428, 0.0
    %1433 = vadd.xlane.f32.xlu0 %v1432
    %v1434 = vpop.xlane.xlu0 %1433
    %v1435 = vrcp.pop %v1431
    %v1436 = vrcp.pop %v1434
    %v1437 = vmul.f32 %v1426, %v1435
    %v1438 = vmul.f32 %v1428, %v1436
    %v1439 = vpack.c.bf16 %v1438, %v1437
    %1441 = vrot.lane.b32.xlu0 %v1330, 64
    %v1442 = vpop.permute.xlu0 %1441
    %v1445 = vsel %vm447, %v1439, 0
    %1447 = vmatpush.bf16.msra.mxu0 0
    %1448 = vmatpush.bf16.msra.mxu0 0
    %1449 = vmatpush.bf16.msra.mxu0 0
    %1450 = vmatpush.bf16.msra.mxu0 0
    %1451 = vmatpush.bf16.msra.mxu0 0
    %1452 = vmatpush.bf16.msra.mxu0 0
    %1453 = vmatpush.bf16.msra.mxu0 0
    %1454 = vmatpush.bf16.msra.mxu0 %v1442
    %1455 = vmatmul.bf16.gmra.mxu0 %v1445
    %v1456 = vpop.f32.mrf.mxu0
    %v1457 = vadd.f32 0.0, %v1456
    %v1458 = vpop.f32.mrf.mxu0
    %v1459 = vadd.f32 0.0, %v1458
    %1460 = vdwg.mxu0
    %1463 = vrot.lane.b32.xlu0 %v1457, 64
    %v1464 = vpop.permute.xlu0 %1463
    %1465 = vrot.lane.b32.xlu0 %v1459, 64
    %v1466 = vpop.permute.xlu0 %1465
    %v1469 = vsel %vm426, %v1387, %v1464
    %v1470 = vsel %vm426, %v1389, %v1466
    %v1471 = vpack.c.bf16 %v1470, %v1469
    %s1472 = scalar_lea.vmem [#allocation10], 64
    %v1473 = vld [vmem:[%s1472] sm:$0xf]
    %v1474 = vld [vmem:[%s1472 + $0x4] sm:$0xf]
    %v1475 = vld [vmem:[%s1472 + $0x8] sm:$0xf]
    %v1476 = vld [vmem:[%s1472 + $0xc] sm:$0xf]
    %v1477 = vld [vmem:[%s1472 + $0x10] sm:$0xf]
    %v1478 = vld [vmem:[%s1472 + $0x14] sm:$0xf]
    %v1479 = vld [vmem:[%s1472 + $0x18] sm:$0xf]
    %v1480 = vld [vmem:[%s1472 + $0x1c] sm:$0xf]
    %v1481 = vld [vmem:[%s1472 + $0x20] sm:$0xf]
    %v1482 = vld [vmem:[%s1472 + $0x24] sm:$0xf]
    %v1483 = vld [vmem:[%s1472 + $0x28] sm:$0xf]
    %v1484 = vld [vmem:[%s1472 + $0x2c] sm:$0xf]
    %v1485 = vld [vmem:[%s1472 + $0x30] sm:$0xf]
    %v1486 = vld [vmem:[%s1472 + $0x34] sm:$0xf]
    %v1487 = vld [vmem:[%s1472 + $0x38] sm:$0xf]
    %v1488 = vld [vmem:[%s1472 + $0x3c] sm:$0xf]
    %s1489 = scalar_lea.vmem %s5, 1
    %v1490 = vld [vmem:[%s1489] sm:$0x1]
    %v1492 = vperm.slane %v1490, 0
    %v1510 = vunpack.c.l.b16 %v1473
    %v1511 = vunpack.c.l.b16 %v1474
    %v1512 = vunpack.c.l.b16 %v1475
    %v1513 = vunpack.c.l.b16 %v1476
    %v1514 = vunpack.c.l.b16 %v1477
    %v1515 = vunpack.c.l.b16 %v1478
    %v1516 = vunpack.c.l.b16 %v1479
    %v1517 = vunpack.c.l.b16 %v1480
    %v1518 = vunpack.c.l.b16 %v1481
    %v1519 = vunpack.c.l.b16 %v1482
    %v1520 = vunpack.c.l.b16 %v1483
    %v1521 = vunpack.c.l.b16 %v1484
    %v1522 = vunpack.c.l.b16 %v1485
    %v1523 = vunpack.c.l.b16 %v1486
    %v1524 = vunpack.c.l.b16 %v1487
    %v1525 = vunpack.c.l.b16 %v1488
    %v1526 = vpack.c.b16 %v1511, %v1510
    %v1527 = vpack.c.b16 %v1513, %v1512
    %v1528 = vpack.c.b16 %v1515, %v1514
    %v1529 = vpack.c.b16 %v1517, %v1516
    %v1530 = vpack.c.b16 %v1519, %v1518
    %v1531 = vpack.c.b16 %v1521, %v1520
    %v1532 = vpack.c.b16 %v1523, %v1522
    %v1533 = vpack.c.b16 %v1525, %v1524
    %1542 = vmatpush.bf16.msra.mxu0 %v1533
    %1543 = vmatpush.bf16.msra.mxu0 %v1532
    %1544 = vmatpush.bf16.msra.mxu0 %v1531
    %1545 = vmatpush.bf16.msra.mxu0 %v1530
    %1546 = vmatpush.bf16.msra.mxu0 %v1529
    %1547 = vmatpush.bf16.msra.mxu0 %v1528
    %1548 = vmatpush.bf16.msra.mxu0 %v1527
    %1549 = vmatpush.bf16.msra.mxu0 %v1526
    %1550 = vmatmul.bf16.gmra.mxu0 %v1471
    %v1551 = vpop.f32.mrf.mxu0
    %v1552 = vadd.f32 %v1492, %v1551
    %v1553 = vpop.f32.mrf.mxu0
    %v1554 = vadd.f32 %v1492, %v1553
    %1555 = vdwg.mxu0
    %v1556 = vadd.f32 %v1113, %v1552
    %v1557 = vadd.f32 %v1114, %v1554
    %s1558 = scalar_lea.vmem [#allocation11], 1
    %v1559 = vld [vmem:[%s1558] sm:$0x1]
    %s1560 = scalar_lea.vmem [#allocation13], 1
    %v1561 = vld [vmem:[%s1560] sm:$0x1]
    %1562 = vadd.xlane.f32.xlu0 %v1556
    %v1563 = vpop.xlane.xlu0 %1562
    %1564 = vadd.xlane.f32.xlu0 %v1557
    %v1565 = vpop.xlane.xlu0 %1564
    %v1566 = vmul.f32 %v1563, %v665
    %v1567 = vmul.f32 %v1565, %v665
    %v1568 = vsub.f32 %v1556, %v1566
    %v1569 = vsub.f32 %v1557, %v1567
    %v1570 = vmul.f32 %v1568, %v1568
    %v1571 = vmul.f32 %v1569, %v1569
    %1572 = vadd.xlane.f32.xlu0 %v1570
    %v1573 = vpop.xlane.xlu0 %1572
    %1574 = vadd.xlane.f32.xlu0 %v1571
    %v1575 = vpop.xlane.xlu0 %1574
    %v1576 = vmul.f32 %v1573, %v665
    %v1577 = vmul.f32 %v1575, %v665
    %v1578 = vadd.f32 %v1576, 1e-05
    %v1579 = vadd.f32 %v1577, 1e-05
    %v1580 = vrsqrt.pop %v1578
    %v1581 = vmul.f32 %v1580, %v1578
    %v1582 = vmul.f32 %v1581, %v1580
    %v1583 = vmul.f32 0.5, %v1582
    %v1584 = vsub.f32 1.5, %v1583
    %v1585 = vmul.f32 %v1580, %v1584
    %vm1586 = vweird.f32 %v1578
    %vm1587 = vweird.f32 %v1580
    %vm1588 = vmor %vm1586, %vm1587
    %v1589 = vsel %vm1588, %v1580, %v1585
    %v1590 = vrsqrt.pop %v1579
    %v1591 = vmul.f32 %v1590, %v1579
    %v1592 = vmul.f32 %v1591, %v1590
    %v1593 = vmul.f32 0.5, %v1592
    %v1594 = vsub.f32 1.5, %v1593
    %v1595 = vmul.f32 %v1590, %v1594
    %vm1596 = vweird.f32 %v1579
    %vm1597 = vweird.f32 %v1590
    %vm1598 = vmor %vm1596, %vm1597
    %v1599 = vsel %vm1598, %v1590, %v1595
    %v1600 = vmul.f32 %v1568, %v1589
    %v1601 = vmul.f32 %v1569, %v1599
    %v1603 = vperm.slane %v1559, 0
    %v1605 = vmul.f32 %v1600, %v1603
    %v1606 = vmul.f32 %v1601, %v1603
    %v1608 = vperm.slane %v1561, 0
    %v1610 = vadd.f32 %v1605, %v1608
    %v1611 = vadd.f32 %v1606, %v1608
    %s1612 = scalar_lea.vmem [#allocation14], 1
    %v1613 = vld [vmem:[%s1612] sm:$0x1]
    %v1615 = vperm.slane %v1613, 0
    %v1617 = vmul.f32 %v1610, %v1615
    %v1618 = vmul.f32 %v1611, %v1615
    %1619 = vadd.xlane.f32.xlu0 %v1617
    %v1620 = vpop.xlane.xlu0 %1619
    %1621 = vadd.xlane.f32.xlu0 %v1618
    %v1622 = vpop.xlane.xlu0 %1621
    %v1623 = vxor.u32 %v1620, 2147483648
    %v1624 = vxor.u32 %v1622, 2147483648
    %v1625 = vmul.f32 %v1623, 1.442695
    %v1626 = vpow.pop %v1625
    %v1627 = vmul.f32 %v1624, 1.442695
    %v1628 = vpow.pop %v1627
    %v1629 = vadd.f32 %v1626, 1.0
    %v1630 = vadd.f32 %v1628, 1.0
    %v1631 = vrcp.pop %v1629
    %v1632 = vmul.f32 %v1629, %v1631
    %v1633 = vsub.f32 1.0, %v1632
    %v1634 = vmul.f32 %v1631, %v1633
    %v1635 = vadd.f32 %v1631, %v1634
    %vm1636 = vweird.f32 %v1629
    %vm1637 = vweird.f32 %v1631
    %vm1638 = vmor %vm1636, %vm1637
    %v1639 = vsel %vm1638, %v1631, %v1635
    %v1640 = vand.u32 2147483647, %v1629
    %vm1641 = vcmp.eq.f32.partialorder %v1640, 8.507059e+37
    %v1642 = vand.u32 %v1629, 2147483648
    %v1643 = vor.u32 1.1754944e-38, %v1642
    %v1644 = vsel %vm1641, %v1643, %v1639
    %v1645 = vmul.f32 1.0, %v1644
    %v1646 = vrcp.pop %v1630
    %v1647 = vmul.f32 %v1630, %v1646
    %v1648 = vsub.f32 1.0, %v1647
    %v1649 = vmul.f32 %v1646, %v1648
    %v1650 = vadd.f32 %v1646, %v1649
    %vm1651 = vweird.f32 %v1630
    %vm1652 = vweird.f32 %v1646
    %vm1653 = vmor %vm1651, %vm1652
    %v1654 = vsel %vm1653, %v1646, %v1650
    %v1655 = vand.u32 2147483647, %v1630
    %vm1656 = vcmp.eq.f32.partialorder %v1655, 8.507059e+37
    %v1657 = vand.u32 %v1630, 2147483648
    %v1658 = vor.u32 1.1754944e-38, %v1657
    %v1659 = vsel %vm1656, %v1658, %v1654
    %v1660 = vmul.f32 1.0, %v1659
    %v1661 = vpack.c.bf16 %v1611, %v1610
    %s1662 = scalar_lea.vmem [#allocation16], 128
    %v1663 = vld [vmem:[%s1662] sm:$0xff]
    %v1664 = vld [vmem:[%s1662 + $0x8] sm:$0xff]
    %v1665 = vld [vmem:[%s1662 + $0x10] sm:$0xff]
    %v1666 = vld [vmem:[%s1662 + $0x18] sm:$0xff]
    %v1667 = vld [vmem:[%s1662 + $0x20] sm:$0xff]
    %v1668 = vld [vmem:[%s1662 + $0x28] sm:$0xff]
    %v1669 = vld [vmem:[%s1662 + $0x30] sm:$0xff]
    %v1670 = vld [vmem:[%s1662 + $0x38] sm:$0xff]
    %v1671 = vld [vmem:[%s1662 + $0x40] sm:$0xff]
    %v1672 = vld [vmem:[%s1662 + $0x48] sm:$0xff]
    %v1673 = vld [vmem:[%s1662 + $0x50] sm:$0xff]
    %v1674 = vld [vmem:[%s1662 + $0x58] sm:$0xff]
    %v1675 = vld [vmem:[%s1662 + $0x60] sm:$0xff]
    %v1676 = vld [vmem:[%s1662 + $0x68] sm:$0xff]
    %v1677 = vld [vmem:[%s1662 + $0x70] sm:$0xff]
    %v1678 = vld [vmem:[%s1662 + $0x78] sm:$0xff]
    %s1679 = scalar_lea.vmem %s10, 2
    %v1680 = vld [vmem:[%s1679] sm:$0x3]
    %v1682 = vperm.slane %v1680, 0
    %v1683 = vperm.slane %v1680, 1
    %v1702 = vunpack.c.l.b16 %v1663
    %v1703 = vunpack.c.h.b16 %v1663
    %v1704 = vunpack.c.l.b16 %v1664
    %v1705 = vunpack.c.h.b16 %v1664
    %v1706 = vunpack.c.l.b16 %v1665
    %v1707 = vunpack.c.h.b16 %v1665
    %v1708 = vunpack.c.l.b16 %v1666
    %v1709 = vunpack.c.h.b16 %v1666
    %v1710 = vunpack.c.l.b16 %v1667
    %v1711 = vunpack.c.h.b16 %v1667
    %v1712 = vunpack.c.l.b16 %v1668
    %v1713 = vunpack.c.h.b16 %v1668
    %v1714 = vunpack.c.l.b16 %v1669
    %v1715 = vunpack.c.h.b16 %v1669
    %v1716 = vunpack.c.l.b16 %v1670
    %v1717 = vunpack.c.h.b16 %v1670
    %v1718 = vunpack.c.l.b16 %v1671
    %v1719 = vunpack.c.h.b16 %v1671
    %v1720 = vunpack.c.l.b16 %v1672
    %v1721 = vunpack.c.h.b16 %v1672
    %v1722 = vunpack.c.l.b16 %v1673
    %v1723 = vunpack.c.h.b16 %v1673
    %v1724 = vunpack.c.l.b16 %v1674
    %v1725 = vunpack.c.h.b16 %v1674
    %v1726 = vunpack.c.l.b16 %v1675
    %v1727 = vunpack.c.h.b16 %v1675
    %v1728 = vunpack.c.l.b16 %v1676
    %v1729 = vunpack.c.h.b16 %v1676
    %v1730 = vunpack.c.l.b16 %v1677
    %v1731 = vunpack.c.h.b16 %v1677
    %v1732 = vunpack.c.l.b16 %v1678
    %v1733 = vunpack.c.h.b16 %v1678
    %v1734 = vpack.c.b16 %v1704, %v1702
    %v1735 = vpack.c.b16 %v1705, %v1703
    %v1736 = vpack.c.b16 %v1708, %v1706
    %v1737 = vpack.c.b16 %v1709, %v1707
    %v1738 = vpack.c.b16 %v1712, %v1710
    %v1739 = vpack.c.b16 %v1713, %v1711
    %v1740 = vpack.c.b16 %v1716, %v1714
    %v1741 = vpack.c.b16 %v1717, %v1715
    %v1742 = vpack.c.b16 %v1720, %v1718
    %v1743 = vpack.c.b16 %v1721, %v1719
    %v1744 = vpack.c.b16 %v1724, %v1722
    %v1745 = vpack.c.b16 %v1725, %v1723
    %v1746 = vpack.c.b16 %v1728, %v1726
    %v1747 = vpack.c.b16 %v1729, %v1727
    %v1748 = vpack.c.b16 %v1732, %v1730
    %v1749 = vpack.c.b16 %v1733, %v1731
    %1766 = vmatpush.bf16.msra.mxu0 %v1748
    %1767 = vmatpush.bf16.msra.mxu0 %v1746
    %1768 = vmatpush.bf16.msra.mxu0 %v1744
    %1769 = vmatpush.bf16.msra.mxu0 %v1742
    %1770 = vmatpush.bf16.msra.mxu0 %v1740
    %1771 = vmatpush.bf16.msra.mxu0 %v1738
    %1772 = vmatpush.bf16.msra.mxu0 %v1736
    %1773 = vmatpush.bf16.msra.mxu0 %v1734
    %1774 = vmatmul.bf16.gmra.mxu0 %v1661
    %v1775 = vpop.f32.mrf.mxu0
    %v1776 = vadd.f32 %v1682, %v1775
    %v1777 = vpop.f32.mrf.mxu0
    %v1778 = vadd.f32 %v1682, %v1777
    %1779 = vdwg.mxu0
    %1780 = vmatpush.bf16.msra.mxu0 %v1749
    %1781 = vmatpush.bf16.msra.mxu0 %v1747
    %1782 = vmatpush.bf16.msra.mxu0 %v1745
    %1783 = vmatpush.bf16.msra.mxu0 %v1743
    %1784 = vmatpush.bf16.msra.mxu0 %v1741
    %1785 = vmatpush.bf16.msra.mxu0 %v1739
    %1786 = vmatpush.bf16.msra.mxu0 %v1737
    %1787 = vmatpush.bf16.msra.mxu0 %v1735
    %1788 = vmatmul.bf16.gmra.mxu0 %v1661
    %v1789 = vpop.f32.mrf.mxu0
    %v1790 = vadd.f32 %v1683, %v1789
    %v1791 = vpop.f32.mrf.mxu0
    %v1792 = vadd.f32 %v1683, %v1791
    %1793 = vdwg.mxu0
    %v1794 = vmul.f32 %v1776, %v1645
    %v1795 = vmul.f32 %v1790, %v1645
    %v1796 = vmul.f32 %v1778, %v1660
    %v1797 = vmul.f32 %v1792, %v1660
    %v1798 = vmax.f32 %v1794, 0.0
    %v1799 = vmax.f32 %v1795, 0.0
    %v1800 = vmax.f32 %v1796, 0.0
    %v1801 = vmax.f32 %v1797, 0.0
    %v1802 = vpack.c.bf16 %v1800, %v1798
    %v1803 = vpack.c.bf16 %v1801, %v1799
    %s1804 = scalar_lea.vmem [#allocation17], 128
    %v1805 = vld [vmem:[%s1804] sm:$0xf]
    %v1806 = vld [vmem:[%s1804 + $0x4] sm:$0xf]
    %v1807 = vld [vmem:[%s1804 + $0x8] sm:$0xf]
    %v1808 = vld [vmem:[%s1804 + $0xc] sm:$0xf]
    %v1809 = vld [vmem:[%s1804 + $0x10] sm:$0xf]
    %v1810 = vld [vmem:[%s1804 + $0x14] sm:$0xf]
    %v1811 = vld [vmem:[%s1804 + $0x18] sm:$0xf]
    %v1812 = vld [vmem:[%s1804 + $0x1c] sm:$0xf]
    %v1813 = vld [vmem:[%s1804 + $0x20] sm:$0xf]
    %v1814 = vld [vmem:[%s1804 + $0x24] sm:$0xf]
    %v1815 = vld [vmem:[%s1804 + $0x28] sm:$0xf]
    %v1816 = vld [vmem:[%s1804 + $0x2c] sm:$0xf]
    %v1817 = vld [vmem:[%s1804 + $0x30] sm:$0xf]
    %v1818 = vld [vmem:[%s1804 + $0x34] sm:$0xf]
    %v1819 = vld [vmem:[%s1804 + $0x38] sm:$0xf]
    %v1820 = vld [vmem:[%s1804 + $0x3c] sm:$0xf]
    %v1821 = vld [vmem:[%s1804 + $0x40] sm:$0xf]
    %v1822 = vld [vmem:[%s1804 + $0x44] sm:$0xf]
    %v1823 = vld [vmem:[%s1804 + $0x48] sm:$0xf]
    %v1824 = vld [vmem:[%s1804 + $0x4c] sm:$0xf]
    %v1825 = vld [vmem:[%s1804 + $0x50] sm:$0xf]
    %v1826 = vld [vmem:[%s1804 + $0x54] sm:$0xf]
    %v1827 = vld [vmem:[%s1804 + $0x58] sm:$0xf]
    %v1828 = vld [vmem:[%s1804 + $0x5c] sm:$0xf]
    %v1829 = vld [vmem:[%s1804 + $0x60] sm:$0xf]
    %v1830 = vld [vmem:[%s1804 + $0x64] sm:$0xf]
    %v1831 = vld [vmem:[%s1804 + $0x68] sm:$0xf]
    %v1832 = vld [vmem:[%s1804 + $0x6c] sm:$0xf]
    %v1833 = vld [vmem:[%s1804 + $0x70] sm:$0xf]
    %v1834 = vld [vmem:[%s1804 + $0x74] sm:$0xf]
    %v1835 = vld [vmem:[%s1804 + $0x78] sm:$0xf]
    %v1836 = vld [vmem:[%s1804 + $0x7c] sm:$0xf]
    %s1837 = scalar_lea.vmem %s12, 1
    %v1838 = vld [vmem:[%s1837] sm:$0x1]
    %v1840 = vperm.slane %v1838, 0
    %v1874 = vunpack.c.l.b16 %v1805
    %v1875 = vunpack.c.l.b16 %v1806
    %v1876 = vunpack.c.l.b16 %v1807
    %v1877 = vunpack.c.l.b16 %v1808
    %v1878 = vunpack.c.l.b16 %v1809
    %v1879 = vunpack.c.l.b16 %v1810
    %v1880 = vunpack.c.l.b16 %v1811
    %v1881 = vunpack.c.l.b16 %v1812
    %v1882 = vunpack.c.l.b16 %v1813
    %v1883 = vunpack.c.l.b16 %v1814
    %v1884 = vunpack.c.l.b16 %v1815
    %v1885 = vunpack.c.l.b16 %v1816
    %v1886 = vunpack.c.l.b16 %v1817
    %v1887 = vunpack.c.l.b16 %v1818
    %v1888 = vunpack.c.l.b16 %v1819
    %v1889 = vunpack.c.l.b16 %v1820
    %v1890 = vunpack.c.l.b16 %v1821
    %v1891 = vunpack.c.l.b16 %v1822
    %v1892 = vunpack.c.l.b16 %v1823
    %v1893 = vunpack.c.l.b16 %v1824
    %v1894 = vunpack.c.l.b16 %v1825
    %v1895 = vunpack.c.l.b16 %v1826
    %v1896 = vunpack.c.l.b16 %v1827
    %v1897 = vunpack.c.l.b16 %v1828
    %v1898 = vunpack.c.l.b16 %v1829
    %v1899 = vunpack.c.l.b16 %v1830
    %v1900 = vunpack.c.l.b16 %v1831
    %v1901 = vunpack.c.l.b16 %v1832
    %v1902 = vunpack.c.l.b16 %v1833
    %v1903 = vunpack.c.l.b16 %v1834
    %v1904 = vunpack.c.l.b16 %v1835
    %v1905 = vunpack.c.l.b16 %v1836
    %v1906 = vpack.c.b16 %v1875, %v1874
    %v1907 = vpack.c.b16 %v1877, %v1876
    %v1908 = vpack.c.b16 %v1879, %v1878
    %v1909 = vpack.c.b16 %v1881, %v1880
    %v1910 = vpack.c.b16 %v1883, %v1882
    %v1911 = vpack.c.b16 %v1885, %v1884
    %v1912 = vpack.c.b16 %v1887, %v1886
    %v1913 = vpack.c.b16 %v1889, %v1888
    %v1914 = vpack.c.b16 %v1891, %v1890
    %v1915 = vpack.c.b16 %v1893, %v1892
    %v1916 = vpack.c.b16 %v1895, %v1894
    %v1917 = vpack.c.b16 %v1897, %v1896
    %v1918 = vpack.c.b16 %v1899, %v1898
    %v1919 = vpack.c.b16 %v1901, %v1900
    %v1920 = vpack.c.b16 %v1903, %v1902
    %v1921 = vpack.c.b16 %v1905, %v1904
    %1938 = vmatpush.bf16.msra.mxu0 %v1913
    %1939 = vmatpush.bf16.msra.mxu0 %v1912
    %1940 = vmatpush.bf16.msra.mxu0 %v1911
    %1941 = vmatpush.bf16.msra.mxu0 %v1910
    %1942 = vmatpush.bf16.msra.mxu0 %v1909
    %1943 = vmatpush.bf16.msra.mxu0 %v1908
    %1944 = vmatpush.bf16.msra.mxu0 %v1907
    %1945 = vmatpush.bf16.msra.mxu0 %v1906
    %1946 = vmatmul.bf16.gmra.mxu0 %v1802
    %v1947 = vpop.f32.mrf.mxu0
    %v1948 = vadd.f32 %v1840, %v1947
    %v1949 = vpop.f32.mrf.mxu0
    %v1950 = vadd.f32 %v1840, %v1949
    %1951 = vdwg.mxu0
    %1952 = vmatpush.bf16.msra.mxu0 %v1921
    %1953 = vmatpush.bf16.msra.mxu0 %v1920
    %1954 = vmatpush.bf16.msra.mxu0 %v1919
    %1955 = vmatpush.bf16.msra.mxu0 %v1918
    %1956 = vmatpush.bf16.msra.mxu0 %v1917
    %1957 = vmatpush.bf16.msra.mxu0 %v1916
    %1958 = vmatpush.bf16.msra.mxu0 %v1915
    %1959 = vmatpush.bf16.msra.mxu0 %v1914
    %1960 = vmatmul.bf16.gmra.mxu0 %v1803
    %v1961 = vpop.f32.mrf.mxu0
    %v1962 = vadd.f32 %v1948, %v1961
    %v1963 = vpop.f32.mrf.mxu0
    %v1964 = vadd.f32 %v1950, %v1963
    %1965 = vdwg.mxu0
    %v1966 = vadd.f32 %v1610, %v1962
    %v1967 = vadd.f32 %v1611, %v1964
    %s1968 = scalar_lea.vmem %s13, 1
    %v1969 = vld [vmem:[%s1968] sm:$0x1]
    %s1970 = scalar_lea.vmem %s14, 1
    %v1971 = vld [vmem:[%s1970] sm:$0x1]
    %1972 = vadd.xlane.f32.xlu0 %v1966
    %v1973 = vpop.xlane.xlu0 %1972
    %1974 = vadd.xlane.f32.xlu0 %v1967
    %v1975 = vpop.xlane.xlu0 %1974
    %v1976 = vmul.f32 %v1973, %v665
    %v1977 = vmul.f32 %v1975, %v665
    %v1978 = vsub.f32 %v1966, %v1976
    %v1979 = vsub.f32 %v1967, %v1977
    %v1980 = vmul.f32 %v1978, %v1978
    %v1981 = vmul.f32 %v1979, %v1979
    %1982 = vadd.xlane.f32.xlu0 %v1980
    %v1983 = vpop.xlane.xlu0 %1982
    %1984 = vadd.xlane.f32.xlu0 %v1981
    %v1985 = vpop.xlane.xlu0 %1984
    %v1986 = vmul.f32 %v1983, %v665
    %v1987 = vmul.f32 %v1985, %v665
    %v1988 = vadd.f32 %v1986, 1e-05
    %v1989 = vadd.f32 %v1987, 1e-05
    %v1990 = vrsqrt.pop %v1988
    %v1991 = vmul.f32 %v1990, %v1988
    %v1992 = vmul.f32 %v1991, %v1990
    %v1993 = vmul.f32 0.5, %v1992
    %v1994 = vsub.f32 1.5, %v1993
    %v1995 = vmul.f32 %v1990, %v1994
    %vm1996 = vweird.f32 %v1988
    %vm1997 = vweird.f32 %v1990
    %vm1998 = vmor %vm1996, %vm1997
    %v1999 = vsel %vm1998, %v1990, %v1995
    %v2000 = vrsqrt.pop %v1989
    %v2001 = vmul.f32 %v2000, %v1989
    %v2002 = vmul.f32 %v2001, %v2000
    %v2003 = vmul.f32 0.5, %v2002
    %v2004 = vsub.f32 1.5, %v2003
    %v2005 = vmul.f32 %v2000, %v2004
    %vm2006 = vweird.f32 %v1989
    %vm2007 = vweird.f32 %v2000
    %vm2008 = vmor %vm2006, %vm2007
    %v2009 = vsel %vm2008, %v2000, %v2005
    %v2010 = vmul.f32 %v1978, %v1999
    %v2011 = vmul.f32 %v1979, %v2009
    %v2013 = vperm.slane %v1969, 0
    %v2015 = vmul.f32 %v2010, %v2013
    %v2016 = vmul.f32 %v2011, %v2013
    %v2018 = vperm.slane %v1971, 0
    %v2020 = vadd.f32 %v2015, %v2018
    %v2021 = vadd.f32 %v2016, %v2018
    %2022 = vst [vmem:[#allocation19] sm:$0xff] %v2020
    %2023 = vst [vmem:[#allocation19 + $0x8] sm:$0xff] %v2021
    // Predicated region
    $region102: #{tpu_custom_call.1} parent=1 // pred_check
      _
    $region103: #{tpu_custom_call.1} parent=1 // pred_check_branch
      %2025 = sbr.rel (0) target = $region105
    $region104: #{tpu_custom_call.1} parent=1 // pred_region
      %2027 = vsyncadd [#allocation4], 0
      %s2028 = sshll.u32 [#allocation19], 4
      %s2029 = int_to_ptr.vmem [resolvable:$true] %s2028
      %s2030 = sshll.u32 %s15, 4
      %s2031 = int_to_ptr.hbm [resolvable:$true] %s2030
      %2036 = dma.vmem_to_hbm [thread:$0]  %s2029, 256, %s2031, [#allocation4], 128, 128, 8
    $region105: #{tpu_custom_call.1} parent=1 // pred_fallthru
      _
    // Predicated region
    $region106: #{tpu_custom_call.1} parent=1 // pred_check
      _
    $region107: #{tpu_custom_call.1} parent=1 // pred_check_branch
      %2038 = sbr.rel (0) target = $region109
    $region108: #{tpu_custom_call.1} parent=1 // pred_region
      %2040 = dma.done [#allocation4], 256
    $region109: #{tpu_custom_call.1} parent=1 // pred_fallthru
      _
    %2041 = vsyncpa [#allocation3], 1
    %2042 = vsyncpa [#allocation6], 1
    %2043 = vsyncpa [#allocation9], 1
    %2044 = vsyncpa [#allocation12], 1
    %2045 = vsyncpa [#allocation15], 1
    %2046 = vsyncpa [#allocation18], 1
    %2047 = vsyncpa [#allocation4], 1

</llo_original>
